<compile_context>
chip_gen: v5e
topology: v5e:2x2
jax: 0.10.0
libtpu: 0.0.40
codegen_flags: <defaults>
</compile_context>

<pallas_src>
import functools

import jax
import jax.numpy as jnp
from jax import lax
from jax.experimental import pallas as pl
from jax.experimental.pallas import tpu as pltpu

# ----------------------------- model config ---------------------------------
B = 2            # batch
S = 8            # sequence length (incl. CLS/SEP)
HIDDEN = 128     # hidden size (768 in real ProtBERT)
N_HEADS = 4
HEAD_DIM = HIDDEN // N_HEADS
INTERMEDIATE = 256
N_LAYERS = 2
VOCAB = 30       # ProtBERT vocab size
TYPE_VOCAB = 2
MAX_POS = 16
LN_EPS = 1e-12
CLS_HIDDEN = 20  # classification head: Linear(H, 20) -> Dropout -> ReLU -> Linear(20, 2)
N_CLASSES = 2
CLS_PAD = 128    # lane-dense padded width of the 20-wide intermediate
LOGIT_PAD = 128  # lane-dense padded width of the 2-wide logits


# ------------------------------ kernel helpers -------------------------------
def _layernorm(x, g, b, eps):
    mu = jnp.mean(x, axis=-1, keepdims=True)
    var = jnp.mean(jnp.square(x - mu), axis=-1, keepdims=True)
    return (x - mu) * lax.rsqrt(var + eps) * g + b


def _gelu_tanh(x):
    # tanh-approximate GELU (EUP path).  Deviation from BERT's exact erf GELU
    # is ~1e-3, below the bf16-weight precision already accepted.
    c = 0.7978845608028654  # sqrt(2/pi)
    return 0.5 * x * (1.0 + jnp.tanh(c * (x + 0.044715 * x * x * x)))


# ------------------------------ fused kernel --------------------------------
def _protbert_kernel(emb_ref, mask_ref, emb_ln_g_ref, emb_ln_b_ref,
                     qkv_w_ref, qkv_b_ref, o_w_ref, o_b_ref,
                     ln1_g_ref, ln1_b_ref,
                     ff1_w_ref, ff1_b_ref, ff2_w_ref, ff2_b_ref,
                     ln2_g_ref, ln2_b_ref,
                     pooler_w_ref, pooler_b_ref,
                     cls1_w_ref, cls1_b_ref, cls2_w_ref, cls2_b_ref,
                     pooled_ref, logits_ref,
                     x_vmem, *, scale, eps):
    """Whole ProtBERT forward for one batch element / one layer grid step."""
    layer = pl.program_id(1)

    # ---- embedding LayerNorm, only on the first layer step of each batch ----
    @pl.when(layer == 0)
    def _():
        x_vmem[...] = _layernorm(emb_ref[...], emb_ln_g_ref[...],
                                 emb_ln_b_ref[...], eps)

    x = x_vmem[...]                               # [S, H] f32, VMEM-resident
    add_mask = mask_ref[...]                      # [1, S] additive mask (pre-built)

    # ---- fused QKV projection (bf16 weights, f32 accumulation) ----
    qkv = jnp.dot(x.astype(jnp.bfloat16), qkv_w_ref[...],
                  preferred_element_type=jnp.float32) + qkv_b_ref[...]   # [S, 3H]
    qb = qkv[:, :HIDDEN].astype(jnp.bfloat16)
    kb = qkv[:, HIDDEN:2 * HIDDEN].astype(jnp.bfloat16)
    vb = qkv[:, 2 * HIDDEN:].astype(jnp.bfloat16)
    wo = o_w_ref[...]                             # [H, H] bf16, row-sliced per head

    # ---- multi-head attention; output projection accumulated per head ----
    # (no head concat: ctx_h @ wo[hD:(h+1)D, :] accumulates K=HEAD_DIM chunks
    #  on the MXU directly into the [S, H] result)
    attn = jnp.zeros((S, HIDDEN), jnp.float32)
    for h in range(N_HEADS):
        sl = slice(h * HEAD_DIM, (h + 1) * HEAD_DIM)
        s = lax.dot_general(qb[:, sl], kb[:, sl],
                            (((1,), (1,)), ((), ())),
                            preferred_element_type=jnp.float32)          # [S, S]
        s = s * scale + add_mask
        s = s - jnp.max(s, axis=-1, keepdims=True)
        p = jnp.exp(s)
        p = p / jnp.sum(p, axis=-1, keepdims=True)
        ctx = jnp.dot(p.astype(jnp.bfloat16), vb[:, sl],
                      preferred_element_type=jnp.float32)                # [S, Dh]
        attn = attn + jnp.dot(ctx.astype(jnp.bfloat16), wo[sl, :],
                              preferred_element_type=jnp.float32)        # [S, H]
    attn = attn + o_b_ref[...]
    x1 = _layernorm(attn + x, ln1_g_ref[...], ln1_b_ref[...], eps)

    # ---- FFN + residual + LayerNorm ----
    ff = jnp.dot(x1.astype(jnp.bfloat16), ff1_w_ref[...],
                 preferred_element_type=jnp.float32) + ff1_b_ref[...]
    ff = _gelu_tanh(ff)
    ff2 = jnp.dot(ff.astype(jnp.bfloat16), ff2_w_ref[...],
                  preferred_element_type=jnp.float32) + ff2_b_ref[...]
    x_out = _layernorm(ff2 + x1, ln2_g_ref[...], ln2_b_ref[...], eps)
    x_vmem[...] = x_out                           # carry to next layer step

    # ---- pooler + classification head, only on the last layer step ----
    @pl.when(layer == pl.num_programs(1) - 1)
    def _():
        cls = x_out[0:1, :]                                              # [1, H]
        pooled = jnp.tanh(jnp.dot(cls.astype(jnp.bfloat16), pooler_w_ref[...],
                                  preferred_element_type=jnp.float32)
                          + pooler_b_ref[...])                           # [1, H]
        pooled_ref[...] = pooled.astype(pooled_ref.dtype)
        # Dropout(0.5) between the two Linear layers is identity at inference.
        h1 = jnp.maximum(jnp.dot(pooled.astype(jnp.bfloat16), cls1_w_ref[...],
                                 preferred_element_type=jnp.float32)
                         + cls1_b_ref[...], 0.0)                         # [1, 128]
        logits = jnp.dot(h1.astype(jnp.bfloat16), cls2_w_ref[...],
                         preferred_element_type=jnp.float32) + cls2_b_ref[...]
        logits_ref[...] = logits.astype(logits_ref.dtype)                # [1, 128]


# ------------------------------ model (glue) ---------------------------------
def protbert_forward(params, input_ids, token_type_ids, attention_mask):
    # Embedding gather + sum is glue (plain JAX); everything else is ONE kernel.
    emb = (params["word_emb"][input_ids]
           + params["pos_emb"][jnp.arange(S)][None, :, :]
           + params["type_emb"][token_type_ids])                        # [B, S, H]
    # Additive key-side mask (HF BERT convention), built once in glue.
    add_mask = ((1.0 - attention_mask.astype(jnp.float32)) * -10000.0
                ).reshape(B, 1, S)

    wmap = lambda b, l: (l, 0, 0)     # stacked per-layer weights (layer grid axis)
    bmap = lambda b, l: (b, 0, 0)     # per-batch activations / outputs
    cmap = lambda b, l: (0, 0)        # shared emb-LN / head params

    pooled, logits_pad = pl.pallas_call(
        functools.partial(_protbert_kernel,
                          scale=1.0 / float(HEAD_DIM) ** 0.5, eps=LN_EPS),
        out_shape=(jax.ShapeDtypeStruct((B, 1, HIDDEN), jnp.float32),
                   jax.ShapeDtypeStruct((B, 1, LOGIT_PAD), jnp.float32)),
        grid_spec=pltpu.PrefetchScalarGridSpec(
            num_scalar_prefetch=0,
            grid=(B, N_LAYERS),
            in_specs=[
                pl.BlockSpec((None, S, HIDDEN), bmap),                  # embeddings
                pl.BlockSpec((None, 1, S), bmap),                       # additive mask
                pl.BlockSpec((1, HIDDEN), cmap),                        # emb LN gamma
                pl.BlockSpec((1, HIDDEN), cmap),                        # emb LN beta
                pl.BlockSpec((None, HIDDEN, 3 * HIDDEN), wmap),         # qkv w
                pl.BlockSpec((None, 1, 3 * HIDDEN), wmap),              # qkv b
                pl.BlockSpec((None, HIDDEN, HIDDEN), wmap),             # attn out w
                pl.BlockSpec((None, 1, HIDDEN), wmap),                  # attn out b
                pl.BlockSpec((None, 1, HIDDEN), wmap),                  # ln1 gamma
                pl.BlockSpec((None, 1, HIDDEN), wmap),                  # ln1 beta
                pl.BlockSpec((None, HIDDEN, INTERMEDIATE), wmap),       # ffn1 w
                pl.BlockSpec((None, 1, INTERMEDIATE), wmap),            # ffn1 b
                pl.BlockSpec((None, INTERMEDIATE, HIDDEN), wmap),       # ffn2 w
                pl.BlockSpec((None, 1, HIDDEN), wmap),                  # ffn2 b
                pl.BlockSpec((None, 1, HIDDEN), wmap),                  # ln2 gamma
                pl.BlockSpec((None, 1, HIDDEN), wmap),                  # ln2 beta
                pl.BlockSpec((HIDDEN, HIDDEN), cmap),                   # pooler w
                pl.BlockSpec((1, HIDDEN), cmap),                        # pooler b
                pl.BlockSpec((HIDDEN, CLS_PAD), cmap),                  # cls1 w (padded)
                pl.BlockSpec((1, CLS_PAD), cmap),                       # cls1 b
                pl.BlockSpec((CLS_PAD, LOGIT_PAD), cmap),               # cls2 w (padded)
                pl.BlockSpec((1, LOGIT_PAD), cmap),                     # cls2 b
            ],
            out_specs=(
                pl.BlockSpec((None, 1, HIDDEN), bmap),                  # pooled
                pl.BlockSpec((None, 1, LOGIT_PAD), bmap),               # logits (padded)
            ),
            scratch_shapes=[pltpu.VMEM((S, HIDDEN), jnp.float32)],      # resident x
        ),
        compiler_params=pltpu.CompilerParams(
            dimension_semantics=("parallel", "arbitrary")),
    )(emb, add_mask,
      params["emb_ln_g"], params["emb_ln_b"],
      params["qkv_w"], params["qkv_b"], params["o_w"], params["o_b"],
      params["ln1_g"], params["ln1_b"],
      params["ff1_w"], params["ff1_b"], params["ff2_w"], params["ff2_b"],
      params["ln2_g"], params["ln2_b"],
      params["pooler_w"], params["pooler_b"],
      params["cls1_w"], params["cls1_b"], params["cls2_w"], params["cls2_b"])

    representation = pooled.reshape(B, HIDDEN)
    output = logits_pad.reshape(B, LOGIT_PAD)[:, :N_CLASSES]
    return output, representation


# ------------------------------ parameter init -------------------------------
def init_params(key):
    std = 0.02
    keys = iter(jax.random.split(key, 32))

    def w(shape, dtype=jnp.float32):
        return (std * jax.random.normal(next(keys), shape, jnp.float32)).astype(dtype)

    def zeros(shape):
        return jnp.zeros(shape, jnp.float32)

    # classification head, zero-padded to lane-dense widths (pads are exactly 0,
    # so the padded columns of the logits are exactly 0 and sliced off in glue).
    cls1_w = jnp.zeros((HIDDEN, CLS_PAD), jnp.float32).at[:, :CLS_HIDDEN].set(
        std * jax.random.normal(next(keys), (HIDDEN, CLS_HIDDEN)))
    cls2_w = jnp.zeros((CLS_PAD, LOGIT_PAD), jnp.float32).at[:CLS_HIDDEN, :N_CLASSES].set(
        std * jax.random.normal(next(keys), (CLS_HIDDEN, N_CLASSES)))

    return {
        "word_emb": w((VOCAB, HIDDEN)),
        "pos_emb": w((MAX_POS, HIDDEN)),
        "type_emb": w((TYPE_VOCAB, HIDDEN)),
        "emb_ln_g": jnp.ones((1, HIDDEN), jnp.float32),
        "emb_ln_b": zeros((1, HIDDEN)),
        # stacked per-layer encoder weights (leading dim = layer index)
        "qkv_w": w((N_LAYERS, HIDDEN, 3 * HIDDEN), jnp.bfloat16),
        "qkv_b": zeros((N_LAYERS, 1, 3 * HIDDEN)),
        "o_w": w((N_LAYERS, HIDDEN, HIDDEN), jnp.bfloat16),
        "o_b": zeros((N_LAYERS, 1, HIDDEN)),
        "ln1_g": jnp.ones((N_LAYERS, 1, HIDDEN), jnp.float32),
        "ln1_b": zeros((N_LAYERS, 1, HIDDEN)),
        "ff1_w": w((N_LAYERS, HIDDEN, INTERMEDIATE), jnp.bfloat16),
        "ff1_b": zeros((N_LAYERS, 1, INTERMEDIATE)),
        "ff2_w": w((N_LAYERS, INTERMEDIATE, HIDDEN), jnp.bfloat16),
        "ff2_b": zeros((N_LAYERS, 1, HIDDEN)),
        "ln2_g": jnp.ones((N_LAYERS, 1, HIDDEN), jnp.float32),
        "ln2_b": zeros((N_LAYERS, 1, HIDDEN)),
        # pooler + classification head
        "pooler_w": w((HIDDEN, HIDDEN), jnp.bfloat16),
        "pooler_b": zeros((1, HIDDEN)),
        "cls1_w": cls1_w.astype(jnp.bfloat16),
        "cls1_b": zeros((1, CLS_PAD)),
        "cls2_w": cls2_w.astype(jnp.bfloat16),
        "cls2_b": zeros((1, LOGIT_PAD)),
    }


# ------------------------------------ main -----------------------------------
if __name__ == "__main__":
    key = jax.random.PRNGKey(0)
    pkey, ikey = jax.random.split(key)
    params = init_params(pkey)

    # Synthetic "tokenized" protein sequence: CLS(=2) ... SEP(=3), padded.
    input_ids = jax.random.randint(ikey, (B, S), 5, VOCAB, dtype=jnp.int32)
    input_ids = input_ids.at[:, 0].set(2)
    input_ids = input_ids.at[0, S - 1].set(3)
    input_ids = input_ids.at[1, S - 3].set(3)
    token_type_ids = jnp.zeros((B, S), jnp.int32)
    attention_mask = jnp.ones((B, S), jnp.int32)
    attention_mask = attention_mask.at[1, S - 2:].set(0)   # pad tail of sample 1

    output, representation = jax.jit(protbert_forward)(
        params, input_ids, token_type_ids, attention_mask)
    jax.block_until_ready((output, representation))

    assert output.shape == (B, N_CLASSES)
    assert representation.shape == (B, HIDDEN)
    assert jnp.all(jnp.isfinite(output)) and jnp.all(jnp.isfinite(representation))
    print("KERNEL_OK")
</pallas_src>

<mosaic_0001>
module attributes {stable_mosaic.version = 11 : i64} {
  func.func @_protbert_kernel(%arg0: i32, %arg1: i32, %arg2: memref<1x8x128xf32, #tpu.memory_space<vmem>>, %arg3: memref<1x1x8xf32, #tpu.memory_space<vmem>>, %arg4: memref<1x128xf32, #tpu.memory_space<vmem>>, %arg5: memref<1x128xf32, #tpu.memory_space<vmem>>, %arg6: memref<1x128x384xbf16, #tpu.memory_space<vmem>>, %arg7: memref<1x1x384xf32, #tpu.memory_space<vmem>>, %arg8: memref<1x128x128xbf16, #tpu.memory_space<vmem>>, %arg9: memref<1x1x128xf32, #tpu.memory_space<vmem>>, %arg10: memref<1x1x128xf32, #tpu.memory_space<vmem>>, %arg11: memref<1x1x128xf32, #tpu.memory_space<vmem>>, %arg12: memref<1x128x256xbf16, #tpu.memory_space<vmem>>, %arg13: memref<1x1x256xf32, #tpu.memory_space<vmem>>, %arg14: memref<1x256x128xbf16, #tpu.memory_space<vmem>>, %arg15: memref<1x1x128xf32, #tpu.memory_space<vmem>>, %arg16: memref<1x1x128xf32, #tpu.memory_space<vmem>>, %arg17: memref<1x1x128xf32, #tpu.memory_space<vmem>>, %arg18: memref<128x128xbf16, #tpu.memory_space<vmem>>, %arg19: memref<1x128xf32, #tpu.memory_space<vmem>>, %arg20: memref<128x128xbf16, #tpu.memory_space<vmem>>, %arg21: memref<1x128xf32, #tpu.memory_space<vmem>>, %arg22: memref<128x128xbf16, #tpu.memory_space<vmem>>, %arg23: memref<1x128xf32, #tpu.memory_space<vmem>>, %arg24: memref<1x1x128xf32, #tpu.memory_space<vmem>>, %arg25: memref<1x1x128xf32, #tpu.memory_space<vmem>>, %arg26: memref<8x128xf32, #tpu.memory_space<vmem>>) attributes {dimension_semantics = [#tpu.dimension_semantics<parallel>, #tpu.dimension_semantics<arbitrary>], iteration_bounds = array<i64: 2, 2>, scalar_prefetch = 0 : i64, scratch_operands = 1 : i64, tpu.core_type = #tpu.core_type<tc>, window_params = [{transform_indices = @transform_0, window_bounds = array<i64: 1, 8, 128>}, {transform_indices = @transform_1, window_bounds = array<i64: 1, 1, 8>}, {pipeline_mode = #tpu.pipeline_mode<synchronous>, transform_indices = @transform_2, window_bounds = array<i64: 1, 128>}, {pipeline_mode = #tpu.pipeline_mode<synchronous>, transform_indices = @transform_3, window_bounds = array<i64: 1, 128>}, {transform_indices = @transform_4, window_bounds = array<i64: 1, 128, 384>}, {transform_indices = @transform_5, window_bounds = array<i64: 1, 1, 384>}, {transform_indices = @transform_6, window_bounds = array<i64: 1, 128, 128>}, {transform_indices = @transform_7, window_bounds = array<i64: 1, 1, 128>}, {transform_indices = @transform_8, window_bounds = array<i64: 1, 1, 128>}, {transform_indices = @transform_9, window_bounds = array<i64: 1, 1, 128>}, {transform_indices = @transform_10, window_bounds = array<i64: 1, 128, 256>}, {transform_indices = @transform_11, window_bounds = array<i64: 1, 1, 256>}, {transform_indices = @transform_12, window_bounds = array<i64: 1, 256, 128>}, {transform_indices = @transform_13, window_bounds = array<i64: 1, 1, 128>}, {transform_indices = @transform_14, window_bounds = array<i64: 1, 1, 128>}, {transform_indices = @transform_15, window_bounds = array<i64: 1, 1, 128>}, {pipeline_mode = #tpu.pipeline_mode<synchronous>, transform_indices = @transform_16, window_bounds = array<i64: 128, 128>}, {pipeline_mode = #tpu.pipeline_mode<synchronous>, transform_indices = @transform_17, window_bounds = array<i64: 1, 128>}, {pipeline_mode = #tpu.pipeline_mode<synchronous>, transform_indices = @transform_18, window_bounds = array<i64: 128, 128>}, {pipeline_mode = #tpu.pipeline_mode<synchronous>, transform_indices = @transform_19, window_bounds = array<i64: 1, 128>}, {pipeline_mode = #tpu.pipeline_mode<synchronous>, transform_indices = @transform_20, window_bounds = array<i64: 128, 128>}, {pipeline_mode = #tpu.pipeline_mode<synchronous>, transform_indices = @transform_21, window_bounds = array<i64: 1, 128>}, {transform_indices = @transform_22, window_bounds = array<i64: 1, 1, 128>}, {transform_indices = @transform_23, window_bounds = array<i64: 1, 1, 128>}]} {
    %c0_i32 = arith.constant 0 : i32
    %0 = arith.cmpi eq, %arg1, %c0_i32 : i32
    %1 = arith.extui %0 : i1 to i32
    %c0_i32_0 = arith.constant 0 : i32
    %2 = arith.cmpi ne, %1, %c0_i32_0 : i32
    scf.if %2 {
      %c0_85 = arith.constant 0 : index
      %c0_86 = arith.constant 0 : index
      %c0_87 = arith.constant 0 : index
      %206 = vector.load %arg2[%c0_85, %c0_86, %c0_87] : memref<1x8x128xf32, #tpu.memory_space<vmem>>, vector<1x8x128xf32>
      %207 = vector.shape_cast %206 : vector<1x8x128xf32> to vector<8x128xf32>
      %c0_88 = arith.constant 0 : index
      %c0_89 = arith.constant 0 : index
      %208 = vector.load %arg4[%c0_88, %c0_89] : memref<1x128xf32, #tpu.memory_space<vmem>>, vector<1x128xf32>
      %c0_90 = arith.constant 0 : index
      %c0_91 = arith.constant 0 : index
      %209 = vector.load %arg5[%c0_90, %c0_91] : memref<1x128xf32, #tpu.memory_space<vmem>>, vector<1x128xf32>
      %cst_92 = arith.constant dense<0.000000e+00> : vector<8xf32>
      %210 = vector.multi_reduction <add>, %207, %cst_92 [1] : vector<8x128xf32> to vector<8xf32>
      %211 = vector.shape_cast %210 : vector<8xf32> to vector<8x1xf32>
      %cst_93 = arith.constant 1.280000e+02 : f32
      %212 = vector.broadcast %cst_93 : f32 to vector<8x1xf32>
      %213 = arith.divf %211, %212 : vector<8x1xf32>
      %214 = vector.broadcast %213 : vector<8x1xf32> to vector<8x128xf32>
      %215 = arith.subf %207, %214 : vector<8x128xf32>
      %216 = arith.mulf %215, %215 : vector<8x128xf32>
      %cst_94 = arith.constant dense<0.000000e+00> : vector<8xf32>
      %217 = vector.multi_reduction <add>, %216, %cst_94 [1] : vector<8x128xf32> to vector<8xf32>
      %218 = vector.shape_cast %217 : vector<8xf32> to vector<8x1xf32>
      %cst_95 = arith.constant 1.280000e+02 : f32
      %219 = vector.broadcast %cst_95 : f32 to vector<8x1xf32>
      %220 = arith.divf %218, %219 : vector<8x1xf32>
      %221 = vector.broadcast %213 : vector<8x1xf32> to vector<8x128xf32>
      %222 = arith.subf %207, %221 : vector<8x128xf32>
      %cst_96 = arith.constant 9.99999996E-13 : f32
      %223 = vector.broadcast %cst_96 : f32 to vector<8x1xf32>
      %224 = arith.addf %220, %223 : vector<8x1xf32>
      %225 = math.rsqrt %224 : vector<8x1xf32>
      %226 = vector.broadcast %225 : vector<8x1xf32> to vector<8x128xf32>
      %227 = arith.mulf %222, %226 : vector<8x128xf32>
      %228 = vector.broadcast %208 : vector<1x128xf32> to vector<8x128xf32>
      %229 = arith.mulf %227, %228 : vector<8x128xf32>
      %230 = vector.broadcast %209 : vector<1x128xf32> to vector<8x128xf32>
      %231 = arith.addf %229, %230 : vector<8x128xf32>
      %c0_97 = arith.constant 0 : index
      %c0_98 = arith.constant 0 : index
      %232 = vector.load %arg26[%c0_97, %c0_98] : memref<8x128xf32, #tpu.memory_space<vmem>>, vector<8x128xf32>
      tpu.vector_store %arg26[%c0_97, %c0_98], %231 {strides = array<i32>} : memref<8x128xf32, #tpu.memory_space<vmem>>, vector<8x128xf32>,
    } else {
    }
    %c0 = arith.constant 0 : index
    %c0_1 = arith.constant 0 : index
    %3 = vector.load %arg26[%c0, %c0_1] : memref<8x128xf32, #tpu.memory_space<vmem>>, vector<8x128xf32>
    %c0_2 = arith.constant 0 : index
    %c0_3 = arith.constant 0 : index
    %c0_4 = arith.constant 0 : index
    %4 = vector.load %arg3[%c0_2, %c0_3, %c0_4] : memref<1x1x8xf32, #tpu.memory_space<vmem>>, vector<1x1x8xf32>
    %5 = vector.shape_cast %4 : vector<1x1x8xf32> to vector<1x8xf32>
    %6 = arith.truncf %3 : vector<8x128xf32> to vector<8x128xbf16>
    %c0_5 = arith.constant 0 : index
    %c0_6 = arith.constant 0 : index
    %c0_7 = arith.constant 0 : index
    %7 = vector.load %arg6[%c0_5, %c0_6, %c0_7] : memref<1x128x384xbf16, #tpu.memory_space<vmem>>, vector<1x128x384xbf16>
    %8 = vector.shape_cast %7 : vector<1x128x384xbf16> to vector<128x384xbf16>
    %cst = arith.constant dense<0.000000e+00> : vector<8x384xf32>
    %9 = tpu.matmul %6, %8, %cst {dimension_numbers = #tpu.dot_dimension_numbers<[1], [0], [0], [1], [0, 0, 1, 1], [], []>} : vector<8x128xbf16>, vector<128x384xbf16>, vector<8x384xf32> -> vector<8x384xf32>
    %c0_8 = arith.constant 0 : index
    %c0_9 = arith.constant 0 : index
    %c0_10 = arith.constant 0 : index
    %10 = vector.load %arg7[%c0_8, %c0_9, %c0_10] : memref<1x1x384xf32, #tpu.memory_space<vmem>>, vector<1x1x384xf32>
    %11 = vector.shape_cast %10 : vector<1x1x384xf32> to vector<1x384xf32>
    %12 = vector.broadcast %11 : vector<1x384xf32> to vector<8x384xf32>
    %13 = arith.addf %9, %12 : vector<8x384xf32>
    %14 = vector.extract_strided_slice %13 {offsets = [0, 0], sizes = [8, 128], strides = [1, 1]} : vector<8x384xf32> to vector<8x128xf32>
    %15 = arith.truncf %14 : vector<8x128xf32> to vector<8x128xbf16>
    %16 = vector.extract_strided_slice %13 {offsets = [0, 128], sizes = [8, 128], strides = [1, 1]} : vector<8x384xf32> to vector<8x128xf32>
    %17 = arith.truncf %16 : vector<8x128xf32> to vector<8x128xbf16>
    %18 = vector.extract_strided_slice %13 {offsets = [0, 256], sizes = [8, 128], strides = [1, 1]} : vector<8x384xf32> to vector<8x128xf32>
    %19 = arith.truncf %18 : vector<8x128xf32> to vector<8x128xbf16>
    %c0_11 = arith.constant 0 : index
    %c0_12 = arith.constant 0 : index
    %c0_13 = arith.constant 0 : index
    %20 = vector.load %arg8[%c0_11, %c0_12, %c0_13] : memref<1x128x128xbf16, #tpu.memory_space<vmem>>, vector<1x128x128xbf16>
    %21 = vector.shape_cast %20 : vector<1x128x128xbf16> to vector<128x128xbf16>
    %cst_14 = arith.constant 0.000000e+00 : f32
    %22 = vector.broadcast %cst_14 : f32 to vector<8x128xf32>
    %23 = vector.extract_strided_slice %15 {offsets = [0, 0], sizes = [8, 32], strides = [1, 1]} : vector<8x128xbf16> to vector<8x32xbf16>
    %24 = vector.extract_strided_slice %17 {offsets = [0, 0], sizes = [8, 32], strides = [1, 1]} : vector<8x128xbf16> to vector<8x32xbf16>
    %cst_15 = arith.constant dense<0.000000e+00> : vector<8x8xf32>
    %25 = tpu.matmul %23, %24, %cst_15 {dimension_numbers = #tpu.dot_dimension_numbers<[1], [1], [0], [0], [0, 0, 1, 0], [], []>} : vector<8x32xbf16>, vector<8x32xbf16>, vector<8x8xf32> -> vector<8x8xf32>
    %cst_16 = arith.constant 0.176776692 : f32
    %26 = vector.broadcast %cst_16 : f32 to vector<8x8xf32>
    %27 = arith.mulf %25, %26 : vector<8x8xf32>
    %28 = vector.broadcast %5 : vector<1x8xf32> to vector<8x8xf32>
    %29 = arith.addf %27, %28 : vector<8x8xf32>
    %cst_17 = arith.constant dense<0xFF800000> : vector<8xf32>
    %30 = vector.multi_reduction <maximumf>, %29, %cst_17 [1] : vector<8x8xf32> to vector<8xf32>
    %31 = vector.shape_cast %30 : vector<8xf32> to vector<8x1xf32>
    %32 = vector.broadcast %31 : vector<8x1xf32> to vector<8x8xf32>
    %33 = arith.subf %29, %32 : vector<8x8xf32>
    %34 = math.exp %33 : vector<8x8xf32>
    %cst_18 = arith.constant dense<0.000000e+00> : vector<8xf32>
    %35 = vector.multi_reduction <add>, %34, %cst_18 [1] : vector<8x8xf32> to vector<8xf32>
    %36 = vector.shape_cast %35 : vector<8xf32> to vector<8x1xf32>
    %37 = vector.broadcast %36 : vector<8x1xf32> to vector<8x8xf32>
    %38 = arith.divf %34, %37 : vector<8x8xf32>
    %39 = arith.truncf %38 : vector<8x8xf32> to vector<8x8xbf16>
    %40 = vector.extract_strided_slice %19 {offsets = [0, 0], sizes = [8, 32], strides = [1, 1]} : vector<8x128xbf16> to vector<8x32xbf16>
    %cst_19 = arith.constant dense<0.000000e+00> : vector<8x32xf32>
    %41 = tpu.matmul %39, %40, %cst_19 {dimension_numbers = #tpu.dot_dimension_numbers<[1], [0], [0], [1], [0, 0, 1, 1], [], []>} : vector<8x8xbf16>, vector<8x32xbf16>, vector<8x32xf32> -> vector<8x32xf32>
    %42 = arith.truncf %41 : vector<8x32xf32> to vector<8x32xbf16>
    %43 = vector.extract_strided_slice %21 {offsets = [0, 0], sizes = [32, 128], strides = [1, 1]} : vector<128x128xbf16> to vector<32x128xbf16>
    %cst_20 = arith.constant dense<0.000000e+00> : vector<8x128xf32>
    %44 = tpu.matmul %42, %43, %cst_20 {dimension_numbers = #tpu.dot_dimension_numbers<[1], [0], [0], [1], [0, 0, 1, 1], [], []>} : vector<8x32xbf16>, vector<32x128xbf16>, vector<8x128xf32> -> vector<8x128xf32>
    %45 = arith.addf %22, %44 : vector<8x128xf32>
    %46 = vector.extract_strided_slice %15 {offsets = [0, 32], sizes = [8, 32], strides = [1, 1]} : vector<8x128xbf16> to vector<8x32xbf16>
    %47 = vector.extract_strided_slice %17 {offsets = [0, 32], sizes = [8, 32], strides = [1, 1]} : vector<8x128xbf16> to vector<8x32xbf16>
    %cst_21 = arith.constant dense<0.000000e+00> : vector<8x8xf32>
    %48 = tpu.matmul %46, %47, %cst_21 {dimension_numbers = #tpu.dot_dimension_numbers<[1], [1], [0], [0], [0, 0, 1, 0], [], []>} : vector<8x32xbf16>, vector<8x32xbf16>, vector<8x8xf32> -> vector<8x8xf32>
    %cst_22 = arith.constant 0.176776692 : f32
    %49 = vector.broadcast %cst_22 : f32 to vector<8x8xf32>
    %50 = arith.mulf %48, %49 : vector<8x8xf32>
    %51 = vector.broadcast %5 : vector<1x8xf32> to vector<8x8xf32>
    %52 = arith.addf %50, %51 : vector<8x8xf32>
    %cst_23 = arith.constant dense<0xFF800000> : vector<8xf32>
    %53 = vector.multi_reduction <maximumf>, %52, %cst_23 [1] : vector<8x8xf32> to vector<8xf32>
    %54 = vector.shape_cast %53 : vector<8xf32> to vector<8x1xf32>
    %55 = vector.broadcast %54 : vector<8x1xf32> to vector<8x8xf32>
    %56 = arith.subf %52, %55 : vector<8x8xf32>
    %57 = math.exp %56 : vector<8x8xf32>
    %cst_24 = arith.constant dense<0.000000e+00> : vector<8xf32>
    %58 = vector.multi_reduction <add>, %57, %cst_24 [1] : vector<8x8xf32> to vector<8xf32>
    %59 = vector.shape_cast %58 : vector<8xf32> to vector<8x1xf32>
    %60 = vector.broadcast %59 : vector<8x1xf32> to vector<8x8xf32>
    %61 = arith.divf %57, %60 : vector<8x8xf32>
    %62 = arith.truncf %61 : vector<8x8xf32> to vector<8x8xbf16>
    %63 = vector.extract_strided_slice %19 {offsets = [0, 32], sizes = [8, 32], strides = [1, 1]} : vector<8x128xbf16> to vector<8x32xbf16>
    %cst_25 = arith.constant dense<0.000000e+00> : vector<8x32xf32>
    %64 = tpu.matmul %62, %63, %cst_25 {dimension_numbers = #tpu.dot_dimension_numbers<[1], [0], [0], [1], [0, 0, 1, 1], [], []>} : vector<8x8xbf16>, vector<8x32xbf16>, vector<8x32xf32> -> vector<8x32xf32>
    %65 = arith.truncf %64 : vector<8x32xf32> to vector<8x32xbf16>
    %66 = vector.extract_strided_slice %21 {offsets = [32, 0], sizes = [32, 128], strides = [1, 1]} : vector<128x128xbf16> to vector<32x128xbf16>
    %cst_26 = arith.constant dense<0.000000e+00> : vector<8x128xf32>
    %67 = tpu.matmul %65, %66, %cst_26 {dimension_numbers = #tpu.dot_dimension_numbers<[1], [0], [0], [1], [0, 0, 1, 1], [], []>} : vector<8x32xbf16>, vector<32x128xbf16>, vector<8x128xf32> -> vector<8x128xf32>
    %68 = arith.addf %45, %67 : vector<8x128xf32>
    %69 = vector.extract_strided_slice %15 {offsets = [0, 64], sizes = [8, 32], strides = [1, 1]} : vector<8x128xbf16> to vector<8x32xbf16>
    %70 = vector.extract_strided_slice %17 {offsets = [0, 64], sizes = [8, 32], strides = [1, 1]} : vector<8x128xbf16> to vector<8x32xbf16>
    %cst_27 = arith.constant dense<0.000000e+00> : vector<8x8xf32>
    %71 = tpu.matmul %69, %70, %cst_27 {dimension_numbers = #tpu.dot_dimension_numbers<[1], [1], [0], [0], [0, 0, 1, 0], [], []>} : vector<8x32xbf16>, vector<8x32xbf16>, vector<8x8xf32> -> vector<8x8xf32>
    %cst_28 = arith.constant 0.176776692 : f32
    %72 = vector.broadcast %cst_28 : f32 to vector<8x8xf32>
    %73 = arith.mulf %71, %72 : vector<8x8xf32>
    %74 = vector.broadcast %5 : vector<1x8xf32> to vector<8x8xf32>
    %75 = arith.addf %73, %74 : vector<8x8xf32>
    %cst_29 = arith.constant dense<0xFF800000> : vector<8xf32>
    %76 = vector.multi_reduction <maximumf>, %75, %cst_29 [1] : vector<8x8xf32> to vector<8xf32>
    %77 = vector.shape_cast %76 : vector<8xf32> to vector<8x1xf32>
    %78 = vector.broadcast %77 : vector<8x1xf32> to vector<8x8xf32>
    %79 = arith.subf %75, %78 : vector<8x8xf32>
    %80 = math.exp %79 : vector<8x8xf32>
    %cst_30 = arith.constant dense<0.000000e+00> : vector<8xf32>
    %81 = vector.multi_reduction <add>, %80, %cst_30 [1] : vector<8x8xf32> to vector<8xf32>
    %82 = vector.shape_cast %81 : vector<8xf32> to vector<8x1xf32>
    %83 = vector.broadcast %82 : vector<8x1xf32> to vector<8x8xf32>
    %84 = arith.divf %80, %83 : vector<8x8xf32>
    %85 = arith.truncf %84 : vector<8x8xf32> to vector<8x8xbf16>
    %86 = vector.extract_strided_slice %19 {offsets = [0, 64], sizes = [8, 32], strides = [1, 1]} : vector<8x128xbf16> to vector<8x32xbf16>
    %cst_31 = arith.constant dense<0.000000e+00> : vector<8x32xf32>
    %87 = tpu.matmul %85, %86, %cst_31 {dimension_numbers = #tpu.dot_dimension_numbers<[1], [0], [0], [1], [0, 0, 1, 1], [], []>} : vector<8x8xbf16>, vector<8x32xbf16>, vector<8x32xf32> -> vector<8x32xf32>
    %88 = arith.truncf %87 : vector<8x32xf32> to vector<8x32xbf16>
    %89 = vector.extract_strided_slice %21 {offsets = [64, 0], sizes = [32, 128], strides = [1, 1]} : vector<128x128xbf16> to vector<32x128xbf16>
    %cst_32 = arith.constant dense<0.000000e+00> : vector<8x128xf32>
    %90 = tpu.matmul %88, %89, %cst_32 {dimension_numbers = #tpu.dot_dimension_numbers<[1], [0], [0], [1], [0, 0, 1, 1], [], []>} : vector<8x32xbf16>, vector<32x128xbf16>, vector<8x128xf32> -> vector<8x128xf32>
    %91 = arith.addf %68, %90 : vector<8x128xf32>
    %92 = vector.extract_strided_slice %15 {offsets = [0, 96], sizes = [8, 32], strides = [1, 1]} : vector<8x128xbf16> to vector<8x32xbf16>
    %93 = vector.extract_strided_slice %17 {offsets = [0, 96], sizes = [8, 32], strides = [1, 1]} : vector<8x128xbf16> to vector<8x32xbf16>
    %cst_33 = arith.constant dense<0.000000e+00> : vector<8x8xf32>
    %94 = tpu.matmul %92, %93, %cst_33 {dimension_numbers = #tpu.dot_dimension_numbers<[1], [1], [0], [0], [0, 0, 1, 0], [], []>} : vector<8x32xbf16>, vector<8x32xbf16>, vector<8x8xf32> -> vector<8x8xf32>
    %cst_34 = arith.constant 0.176776692 : f32
    %95 = vector.broadcast %cst_34 : f32 to vector<8x8xf32>
    %96 = arith.mulf %94, %95 : vector<8x8xf32>
    %97 = vector.broadcast %5 : vector<1x8xf32> to vector<8x8xf32>
    %98 = arith.addf %96, %97 : vector<8x8xf32>
    %cst_35 = arith.constant dense<0xFF800000> : vector<8xf32>
    %99 = vector.multi_reduction <maximumf>, %98, %cst_35 [1] : vector<8x8xf32> to vector<8xf32>
    %100 = vector.shape_cast %99 : vector<8xf32> to vector<8x1xf32>
    %101 = vector.broadcast %100 : vector<8x1xf32> to vector<8x8xf32>
    %102 = arith.subf %98, %101 : vector<8x8xf32>
    %103 = math.exp %102 : vector<8x8xf32>
    %cst_36 = arith.constant dense<0.000000e+00> : vector<8xf32>
    %104 = vector.multi_reduction <add>, %103, %cst_36 [1] : vector<8x8xf32> to vector<8xf32>
    %105 = vector.shape_cast %104 : vector<8xf32> to vector<8x1xf32>
    %106 = vector.broadcast %105 : vector<8x1xf32> to vector<8x8xf32>
    %107 = arith.divf %103, %106 : vector<8x8xf32>
    %108 = arith.truncf %107 : vector<8x8xf32> to vector<8x8xbf16>
    %109 = vector.extract_strided_slice %19 {offsets = [0, 96], sizes = [8, 32], strides = [1, 1]} : vector<8x128xbf16> to vector<8x32xbf16>
    %cst_37 = arith.constant dense<0.000000e+00> : vector<8x32xf32>
    %110 = tpu.matmul %108, %109, %cst_37 {dimension_numbers = #tpu.dot_dimension_numbers<[1], [0], [0], [1], [0, 0, 1, 1], [], []>} : vector<8x8xbf16>, vector<8x32xbf16>, vector<8x32xf32> -> vector<8x32xf32>
    %111 = arith.truncf %110 : vector<8x32xf32> to vector<8x32xbf16>
    %112 = vector.extract_strided_slice %21 {offsets = [96, 0], sizes = [32, 128], strides = [1, 1]} : vector<128x128xbf16> to vector<32x128xbf16>
    %cst_38 = arith.constant dense<0.000000e+00> : vector<8x128xf32>
    %113 = tpu.matmul %111, %112, %cst_38 {dimension_numbers = #tpu.dot_dimension_numbers<[1], [0], [0], [1], [0, 0, 1, 1], [], []>} : vector<8x32xbf16>, vector<32x128xbf16>, vector<8x128xf32> -> vector<8x128xf32>
    %114 = arith.addf %91, %113 : vector<8x128xf32>
    %c0_39 = arith.constant 0 : index
    %c0_40 = arith.constant 0 : index
    %c0_41 = arith.constant 0 : index
    %115 = vector.load %arg9[%c0_39, %c0_40, %c0_41] : memref<1x1x128xf32, #tpu.memory_space<vmem>>, vector<1x1x128xf32>
    %116 = vector.shape_cast %115 : vector<1x1x128xf32> to vector<1x128xf32>
    %117 = vector.broadcast %116 : vector<1x128xf32> to vector<8x128xf32>
    %118 = arith.addf %114, %117 : vector<8x128xf32>
    %119 = arith.addf %118, %3 : vector<8x128xf32>
    %c0_42 = arith.constant 0 : index
    %c0_43 = arith.constant 0 : index
    %c0_44 = arith.constant 0 : index
    %120 = vector.load %arg10[%c0_42, %c0_43, %c0_44] : memref<1x1x128xf32, #tpu.memory_space<vmem>>, vector<1x1x128xf32>
    %121 = vector.shape_cast %120 : vector<1x1x128xf32> to vector<1x128xf32>
    %c0_45 = arith.constant 0 : index
    %c0_46 = arith.constant 0 : index
    %c0_47 = arith.constant 0 : index
    %122 = vector.load %arg11[%c0_45, %c0_46, %c0_47] : memref<1x1x128xf32, #tpu.memory_space<vmem>>, vector<1x1x128xf32>
    %123 = vector.shape_cast %122 : vector<1x1x128xf32> to vector<1x128xf32>
    %cst_48 = arith.constant dense<0.000000e+00> : vector<8xf32>
    %124 = vector.multi_reduction <add>, %119, %cst_48 [1] : vector<8x128xf32> to vector<8xf32>
    %125 = vector.shape_cast %124 : vector<8xf32> to vector<8x1xf32>
    %cst_49 = arith.constant 1.280000e+02 : f32
    %126 = vector.broadcast %cst_49 : f32 to vector<8x1xf32>
    %127 = arith.divf %125, %126 : vector<8x1xf32>
    %128 = vector.broadcast %127 : vector<8x1xf32> to vector<8x128xf32>
    %129 = arith.subf %119, %128 : vector<8x128xf32>
    %130 = arith.mulf %129, %129 : vector<8x128xf32>
    %cst_50 = arith.constant dense<0.000000e+00> : vector<8xf32>
    %131 = vector.multi_reduction <add>, %130, %cst_50 [1] : vector<8x128xf32> to vector<8xf32>
    %132 = vector.shape_cast %131 : vector<8xf32> to vector<8x1xf32>
    %cst_51 = arith.constant 1.280000e+02 : f32
    %133 = vector.broadcast %cst_51 : f32 to vector<8x1xf32>
    %134 = arith.divf %132, %133 : vector<8x1xf32>
    %135 = vector.broadcast %127 : vector<8x1xf32> to vector<8x128xf32>
    %136 = arith.subf %119, %135 : vector<8x128xf32>
    %cst_52 = arith.constant 9.99999996E-13 : f32
    %137 = vector.broadcast %cst_52 : f32 to vector<8x1xf32>
    %138 = arith.addf %134, %137 : vector<8x1xf32>
    %139 = math.rsqrt %138 : vector<8x1xf32>
    %140 = vector.broadcast %139 : vector<8x1xf32> to vector<8x128xf32>
    %141 = arith.mulf %136, %140 : vector<8x128xf32>
    %142 = vector.broadcast %121 : vector<1x128xf32> to vector<8x128xf32>
    %143 = arith.mulf %141, %142 : vector<8x128xf32>
    %144 = vector.broadcast %123 : vector<1x128xf32> to vector<8x128xf32>
    %145 = arith.addf %143, %144 : vector<8x128xf32>
    %146 = arith.truncf %145 : vector<8x128xf32> to vector<8x128xbf16>
    %c0_53 = arith.constant 0 : index
    %c0_54 = arith.constant 0 : index
    %c0_55 = arith.constant 0 : index
    %147 = vector.load %arg12[%c0_53, %c0_54, %c0_55] : memref<1x128x256xbf16, #tpu.memory_space<vmem>>, vector<1x128x256xbf16>
    %148 = vector.shape_cast %147 : vector<1x128x256xbf16> to vector<128x256xbf16>
    %cst_56 = arith.constant dense<0.000000e+00> : vector<8x256xf32>
    %149 = tpu.matmul %146, %148, %cst_56 {dimension_numbers = #tpu.dot_dimension_numbers<[1], [0], [0], [1], [0, 0, 1, 1], [], []>} : vector<8x128xbf16>, vector<128x256xbf16>, vector<8x256xf32> -> vector<8x256xf32>
    %c0_57 = arith.constant 0 : index
    %c0_58 = arith.constant 0 : index
    %c0_59 = arith.constant 0 : index
    %150 = vector.load %arg13[%c0_57, %c0_58, %c0_59] : memref<1x1x256xf32, #tpu.memory_space<vmem>>, vector<1x1x256xf32>
    %151 = vector.shape_cast %150 : vector<1x1x256xf32> to vector<1x256xf32>
    %152 = vector.broadcast %151 : vector<1x256xf32> to vector<8x256xf32>
    %153 = arith.addf %149, %152 : vector<8x256xf32>
    %cst_60 = arith.constant 5.000000e-01 : f32
    %154 = vector.broadcast %cst_60 : f32 to vector<8x256xf32>
    %155 = arith.mulf %154, %153 : vector<8x256xf32>
    %cst_61 = arith.constant 4.471500e-02 : f32
    %156 = vector.broadcast %cst_61 : f32 to vector<8x256xf32>
    %157 = arith.mulf %156, %153 : vector<8x256xf32>
    %158 = arith.mulf %157, %153 : vector<8x256xf32>
    %159 = arith.mulf %158, %153 : vector<8x256xf32>
    %160 = arith.addf %153, %159 : vector<8x256xf32>
    %cst_62 = arith.constant 0.797884583 : f32
    %161 = vector.broadcast %cst_62 : f32 to vector<8x256xf32>
    %162 = arith.mulf %161, %160 : vector<8x256xf32>
    %163 = math.tanh %162 : vector<8x256xf32>
    %cst_63 = arith.constant 1.000000e+00 : f32
    %164 = vector.broadcast %cst_63 : f32 to vector<8x256xf32>
    %165 = arith.addf %164, %163 : vector<8x256xf32>
    %166 = arith.mulf %155, %165 : vector<8x256xf32>
    %167 = arith.truncf %166 : vector<8x256xf32> to vector<8x256xbf16>
    %c0_64 = arith.constant 0 : index
    %c0_65 = arith.constant 0 : index
    %c0_66 = arith.constant 0 : index
    %168 = vector.load %arg14[%c0_64, %c0_65, %c0_66] : memref<1x256x128xbf16, #tpu.memory_space<vmem>>, vector<1x256x128xbf16>
    %169 = vector.shape_cast %168 : vector<1x256x128xbf16> to vector<256x128xbf16>
    %cst_67 = arith.constant dense<0.000000e+00> : vector<8x128xf32>
    %170 = tpu.matmul %167, %169, %cst_67 {dimension_numbers = #tpu.dot_dimension_numbers<[1], [0], [0], [1], [0, 0, 1, 1], [], []>} : vector<8x256xbf16>, vector<256x128xbf16>, vector<8x128xf32> -> vector<8x128xf32>
    %c0_68 = arith.constant 0 : index
    %c0_69 = arith.constant 0 : index
    %c0_70 = arith.constant 0 : index
    %171 = vector.load %arg15[%c0_68, %c0_69, %c0_70] : memref<1x1x128xf32, #tpu.memory_space<vmem>>, vector<1x1x128xf32>
    %172 = vector.shape_cast %171 : vector<1x1x128xf32> to vector<1x128xf32>
    %173 = vector.broadcast %172 : vector<1x128xf32> to vector<8x128xf32>
    %174 = arith.addf %170, %173 : vector<8x128xf32>
    %175 = arith.addf %174, %145 : vector<8x128xf32>
    %c0_71 = arith.constant 0 : index
    %c0_72 = arith.constant 0 : index
    %c0_73 = arith.constant 0 : index
    %176 = vector.load %arg16[%c0_71, %c0_72, %c0_73] : memref<1x1x128xf32, #tpu.memory_space<vmem>>, vector<1x1x128xf32>
    %177 = vector.shape_cast %176 : vector<1x1x128xf32> to vector<1x128xf32>
    %c0_74 = arith.constant 0 : index
    %c0_75 = arith.constant 0 : index
    %c0_76 = arith.constant 0 : index
    %178 = vector.load %arg17[%c0_74, %c0_75, %c0_76] : memref<1x1x128xf32, #tpu.memory_space<vmem>>, vector<1x1x128xf32>
    %179 = vector.shape_cast %178 : vector<1x1x128xf32> to vector<1x128xf32>
    %cst_77 = arith.constant dense<0.000000e+00> : vector<8xf32>
    %180 = vector.multi_reduction <add>, %175, %cst_77 [1] : vector<8x128xf32> to vector<8xf32>
    %181 = vector.shape_cast %180 : vector<8xf32> to vector<8x1xf32>
    %cst_78 = arith.constant 1.280000e+02 : f32
    %182 = vector.broadcast %cst_78 : f32 to vector<8x1xf32>
    %183 = arith.divf %181, %182 : vector<8x1xf32>
    %184 = vector.broadcast %183 : vector<8x1xf32> to vector<8x128xf32>
    %185 = arith.subf %175, %184 : vector<8x128xf32>
    %186 = arith.mulf %185, %185 : vector<8x128xf32>
    %cst_79 = arith.constant dense<0.000000e+00> : vector<8xf32>
    %187 = vector.multi_reduction <add>, %186, %cst_79 [1] : vector<8x128xf32> to vector<8xf32>
    %188 = vector.shape_cast %187 : vector<8xf32> to vector<8x1xf32>
    %cst_80 = arith.constant 1.280000e+02 : f32
    %189 = vector.broadcast %cst_80 : f32 to vector<8x1xf32>
    %190 = arith.divf %188, %189 : vector<8x1xf32>
    %191 = vector.broadcast %183 : vector<8x1xf32> to vector<8x128xf32>
    %192 = arith.subf %175, %191 : vector<8x128xf32>
    %cst_81 = arith.constant 9.99999996E-13 : f32
    %193 = vector.broadcast %cst_81 : f32 to vector<8x1xf32>
    %194 = arith.addf %190, %193 : vector<8x1xf32>
    %195 = math.rsqrt %194 : vector<8x1xf32>
    %196 = vector.broadcast %195 : vector<8x1xf32> to vector<8x128xf32>
    %197 = arith.mulf %192, %196 : vector<8x128xf32>
    %198 = vector.broadcast %177 : vector<1x128xf32> to vector<8x128xf32>
    %199 = arith.mulf %197, %198 : vector<8x128xf32>
    %200 = vector.broadcast %179 : vector<1x128xf32> to vector<8x128xf32>
    %201 = arith.addf %199, %200 : vector<8x128xf32>
    %c0_82 = arith.constant 0 : index
    %c0_83 = arith.constant 0 : index
    %202 = vector.load %arg26[%c0_82, %c0_83] : memref<8x128xf32, #tpu.memory_space<vmem>>, vector<8x128xf32>
    tpu.vector_store %arg26[%c0_82, %c0_83], %201 {strides = array<i32>} : memref<8x128xf32, #tpu.memory_space<vmem>>, vector<8x128xf32>,
    %c1_i32 = arith.constant 1 : i32
    %203 = arith.cmpi eq, %arg1, %c1_i32 : i32
    %204 = arith.extui %203 : i1 to i32
    %c0_i32_84 = arith.constant 0 : i32
    %205 = arith.cmpi ne, %204, %c0_i32_84 : i32
    scf.if %205 {
      %206 = vector.extract_strided_slice %201 {offsets = [0, 0], sizes = [1, 128], strides = [1, 1]} : vector<8x128xf32> to vector<1x128xf32>
      %207 = arith.truncf %206 : vector<1x128xf32> to vector<1x128xbf16>
      %c0_85 = arith.constant 0 : index
      %c0_86 = arith.constant 0 : index
      %208 = vector.load %arg18[%c0_85, %c0_86] : memref<128x128xbf16, #tpu.memory_space<vmem>>, vector<128x128xbf16>
      %cst_87 = arith.constant dense<0.000000e+00> : vector<1x128xf32>
      %209 = tpu.matmul %207, %208, %cst_87 {dimension_numbers = #tpu.dot_dimension_numbers<[1], [0], [0], [1], [0, 0, 1, 1], [], []>} : vector<1x128xbf16>, vector<128x128xbf16>, vector<1x128xf32> -> vector<1x128xf32>
      %c0_88 = arith.constant 0 : index
      %c0_89 = arith.constant 0 : index
      %210 = vector.load %arg19[%c0_88, %c0_89] : memref<1x128xf32, #tpu.memory_space<vmem>>, vector<1x128xf32>
      %211 = arith.addf %209, %210 : vector<1x128xf32>
      %212 = math.tanh %211 : vector<1x128xf32>
      %c0_90 = arith.constant 0 : index
      %c0_91 = arith.constant 0 : index
      %c0_92 = arith.constant 0 : index
      %213 = vector.load %arg24[%c0_90, %c0_91, %c0_92] : memref<1x1x128xf32, #tpu.memory_space<vmem>>, vector<1x1x128xf32>
      %214 = vector.shape_cast %213 : vector<1x1x128xf32> to vector<1x128xf32>
      %215 = vector.shape_cast %212 : vector<1x128xf32> to vector<1x1x128xf32>
      tpu.vector_store %arg24[%c0_90, %c0_91, %c0_92], %215 {strides = array<i32>} : memref<1x1x128xf32, #tpu.memory_space<vmem>>, vector<1x1x128xf32>,
      %216 = arith.truncf %212 : vector<1x128xf32> to vector<1x128xbf16>
      %c0_93 = arith.constant 0 : index
      %c0_94 = arith.constant 0 : index
      %217 = vector.load %arg20[%c0_93, %c0_94] : memref<128x128xbf16, #tpu.memory_space<vmem>>, vector<128x128xbf16>
      %cst_95 = arith.constant dense<0.000000e+00> : vector<1x128xf32>
      %218 = tpu.matmul %216, %217, %cst_95 {dimension_numbers = #tpu.dot_dimension_numbers<[1], [0], [0], [1], [0, 0, 1, 1], [], []>} : vector<1x128xbf16>, vector<128x128xbf16>, vector<1x128xf32> -> vector<1x128xf32>
      %c0_96 = arith.constant 0 : index
      %c0_97 = arith.constant 0 : index
      %219 = vector.load %arg21[%c0_96, %c0_97] : memref<1x128xf32, #tpu.memory_space<vmem>>, vector<1x128xf32>
      %220 = arith.addf %218, %219 : vector<1x128xf32>
      %cst_98 = arith.constant 0.000000e+00 : f32
      %221 = vector.broadcast %cst_98 : f32 to vector<1x128xf32>
      %222 = arith.maximumf %220, %221 : vector<1x128xf32>
      %223 = arith.truncf %222 : vector<1x128xf32> to vector<1x128xbf16>
      %c0_99 = arith.constant 0 : index
      %c0_100 = arith.constant 0 : index
      %224 = vector.load %arg22[%c0_99, %c0_100] : memref<128x128xbf16, #tpu.memory_space<vmem>>, vector<128x128xbf16>
      %cst_101 = arith.constant dense<0.000000e+00> : vector<1x128xf32>
      %225 = tpu.matmul %223, %224, %cst_101 {dimension_numbers = #tpu.dot_dimension_numbers<[1], [0], [0], [1], [0, 0, 1, 1], [], []>} : vector<1x128xbf16>, vector<128x128xbf16>, vector<1x128xf32> -> vector<1x128xf32>
      %c0_102 = arith.constant 0 : index
      %c0_103 = arith.constant 0 : index
      %226 = vector.load %arg23[%c0_102, %c0_103] : memref<1x128xf32, #tpu.memory_space<vmem>>, vector<1x128xf32>
      %227 = arith.addf %225, %226 : vector<1x128xf32>
      %c0_104 = arith.constant 0 : index
      %c0_105 = arith.constant 0 : index
      %c0_106 = arith.constant 0 : index
      %228 = vector.load %arg25[%c0_104, %c0_105, %c0_106] : memref<1x1x128xf32, #tpu.memory_space<vmem>>, vector<1x1x128xf32>
      %229 = vector.shape_cast %228 : vector<1x1x128xf32> to vector<1x128xf32>
      %230 = vector.shape_cast %227 : vector<1x128xf32> to vector<1x1x128xf32>
      tpu.vector_store %arg25[%c0_104, %c0_105, %c0_106], %230 {strides = array<i32>} : memref<1x1x128xf32, #tpu.memory_space<vmem>>, vector<1x1x128xf32>,
    } else {
    }
    return
  }
  func.func @transform_0(%arg0: i32, %arg1: i32) -> (i32, i32, i32) {
    %c0_i32 = arith.constant 0 : i32
    %c0_i32_0 = arith.constant 0 : i32
    %c0_i32_1 = arith.constant 0 : i32
    return %arg0, %c0_i32, %c0_i32_0 : i32, i32, i32
  }
  func.func @transform_1(%arg0: i32, %arg1: i32) -> (i32, i32, i32) {
    %c0_i32 = arith.constant 0 : i32
    %c0_i32_0 = arith.constant 0 : i32
    %c0_i32_1 = arith.constant 0 : i32
    return %arg0, %c0_i32, %c0_i32_0 : i32, i32, i32
  }
  func.func @transform_2(%arg0: i32, %arg1: i32) -> (i32, i32) {
    %c0_i32 = arith.constant 0 : i32
    %c0_i32_0 = arith.constant 0 : i32
    %c0_i32_1 = arith.constant 0 : i32
    return %c0_i32, %c0_i32_0 : i32, i32
  }
  func.func @transform_3(%arg0: i32, %arg1: i32) -> (i32, i32) {
    %c0_i32 = arith.constant 0 : i32
    %c0_i32_0 = arith.constant 0 : i32
    %c0_i32_1 = arith.constant 0 : i32
    return %c0_i32, %c0_i32_0 : i32, i32
  }
  func.func @transform_4(%arg0: i32, %arg1: i32) -> (i32, i32, i32) {
    %c0_i32 = arith.constant 0 : i32
    %c0_i32_0 = arith.constant 0 : i32
    %c0_i32_1 = arith.constant 0 : i32
    return %arg1, %c0_i32, %c0_i32_0 : i32, i32, i32
  }
  func.func @transform_5(%arg0: i32, %arg1: i32) -> (i32, i32, i32) {
    %c0_i32 = arith.constant 0 : i32
    %c0_i32_0 = arith.constant 0 : i32
    %c0_i32_1 = arith.constant 0 : i32
    return %arg1, %c0_i32, %c0_i32_0 : i32, i32, i32
  }
  func.func @transform_6(%arg0: i32, %arg1: i32) -> (i32, i32, i32) {
    %c0_i32 = arith.constant 0 : i32
    %c0_i32_0 = arith.constant 0 : i32
    %c0_i32_1 = arith.constant 0 : i32
    return %arg1, %c0_i32, %c0_i32_0 : i32, i32, i32
  }
  func.func @transform_7(%arg0: i32, %arg1: i32) -> (i32, i32, i32) {
    %c0_i32 = arith.constant 0 : i32
    %c0_i32_0 = arith.constant 0 : i32
    %c0_i32_1 = arith.constant 0 : i32
    return %arg1, %c0_i32, %c0_i32_0 : i32, i32, i32
  }
  func.func @transform_8(%arg0: i32, %arg1: i32) -> (i32, i32, i32) {
    %c0_i32 = arith.constant 0 : i32
    %c0_i32_0 = arith.constant 0 : i32
    %c0_i32_1 = arith.constant 0 : i32
    return %arg1, %c0_i32, %c0_i32_0 : i32, i32, i32
  }
  func.func @transform_9(%arg0: i32, %arg1: i32) -> (i32, i32, i32) {
    %c0_i32 = arith.constant 0 : i32
    %c0_i32_0 = arith.constant 0 : i32
    %c0_i32_1 = arith.constant 0 : i32
    return %arg1, %c0_i32, %c0_i32_0 : i32, i32, i32
  }
  func.func @transform_10(%arg0: i32, %arg1: i32) -> (i32, i32, i32) {
    %c0_i32 = arith.constant 0 : i32
    %c0_i32_0 = arith.constant 0 : i32
    %c0_i32_1 = arith.constant 0 : i32
    return %arg1, %c0_i32, %c0_i32_0 : i32, i32, i32
  }
  func.func @transform_11(%arg0: i32, %arg1: i32) -> (i32, i32, i32) {
    %c0_i32 = arith.constant 0 : i32
    %c0_i32_0 = arith.constant 0 : i32
    %c0_i32_1 = arith.constant 0 : i32
    return %arg1, %c0_i32, %c0_i32_0 : i32, i32, i32
  }
  func.func @transform_12(%arg0: i32, %arg1: i32) -> (i32, i32, i32) {
    %c0_i32 = arith.constant 0 : i32
    %c0_i32_0 = arith.constant 0 : i32
    %c0_i32_1 = arith.constant 0 : i32
    return %arg1, %c0_i32, %c0_i32_0 : i32, i32, i32
  }
  func.func @transform_13(%arg0: i32, %arg1: i32) -> (i32, i32, i32) {
    %c0_i32 = arith.constant 0 : i32
    %c0_i32_0 = arith.constant 0 : i32
    %c0_i32_1 = arith.constant 0 : i32
    return %arg1, %c0_i32, %c0_i32_0 : i32, i32, i32
  }
  func.func @transform_14(%arg0: i32, %arg1: i32) -> (i32, i32, i32) {
    %c0_i32 = arith.constant 0 : i32
    %c0_i32_0 = arith.constant 0 : i32
    %c0_i32_1 = arith.constant 0 : i32
    return %arg1, %c0_i32, %c0_i32_0 : i32, i32, i32
  }
  func.func @transform_15(%arg0: i32, %arg1: i32) -> (i32, i32, i32) {
    %c0_i32 = arith.constant 0 : i32
    %c0_i32_0 = arith.constant 0 : i32
    %c0_i32_1 = arith.constant 0 : i32
    return %arg1, %c0_i32, %c0_i32_0 : i32, i32, i32
  }
  func.func @transform_16(%arg0: i32, %arg1: i32) -> (i32, i32) {
    %c0_i32 = arith.constant 0 : i32
    %c0_i32_0 = arith.constant 0 : i32
    %c0_i32_1 = arith.constant 0 : i32
    return %c0_i32, %c0_i32_0 : i32, i32
  }
  func.func @transform_17(%arg0: i32, %arg1: i32) -> (i32, i32) {
    %c0_i32 = arith.constant 0 : i32
    %c0_i32_0 = arith.constant 0 : i32
    %c0_i32_1 = arith.constant 0 : i32
    return %c0_i32, %c0_i32_0 : i32, i32
  }
  func.func @transform_18(%arg0: i32, %arg1: i32) -> (i32, i32) {
    %c0_i32 = arith.constant 0 : i32
    %c0_i32_0 = arith.constant 0 : i32
    %c0_i32_1 = arith.constant 0 : i32
    return %c0_i32, %c0_i32_0 : i32, i32
  }
  func.func @transform_19(%arg0: i32, %arg1: i32) -> (i32, i32) {
    %c0_i32 = arith.constant 0 : i32
    %c0_i32_0 = arith.constant 0 : i32
    %c0_i32_1 = arith.constant 0 : i32
    return %c0_i32, %c0_i32_0 : i32, i32
  }
  func.func @transform_20(%arg0: i32, %arg1: i32) -> (i32, i32) {
    %c0_i32 = arith.constant 0 : i32
    %c0_i32_0 = arith.constant 0 : i32
    %c0_i32_1 = arith.constant 0 : i32
    return %c0_i32, %c0_i32_0 : i32, i32
  }
  func.func @transform_21(%arg0: i32, %arg1: i32) -> (i32, i32) {
    %c0_i32 = arith.constant 0 : i32
    %c0_i32_0 = arith.constant 0 : i32
    %c0_i32_1 = arith.constant 0 : i32
    return %c0_i32, %c0_i32_0 : i32, i32
  }
  func.func @transform_22(%arg0: i32, %arg1: i32) -> (i32, i32, i32) {
    %c0_i32 = arith.constant 0 : i32
    %c0_i32_0 = arith.constant 0 : i32
    %c0_i32_1 = arith.constant 0 : i32
    return %arg0, %c0_i32, %c0_i32_0 : i32, i32, i32
  }
  func.func @transform_23(%arg0: i32, %arg1: i32) -> (i32, i32, i32) {
    %c0_i32 = arith.constant 0 : i32
    %c0_i32_0 = arith.constant 0 : i32
    %c0_i32_1 = arith.constant 0 : i32
    return %arg0, %c0_i32, %c0_i32_0 : i32, i32, i32
  }
}

</mosaic_0001>

<llo_original>
// kernel: protbert_forward.1
$region0: #{protbert_forward.1}
  #allocation0 [shape = 'u32[]', space=smem, size = 0x4, offset = 0x4, fixed_abs, tag = 'smem constant byte address 0x4 - core index']
  #allocation1 [shape = 'u32[72,128]{1,0:T(1,128)}', space=vmem, size = 0x9000, scoped, tag = 'internal scratch']
  #allocation2 [shape = 'f32[8,128]{1,0:T(8,128)}', space=vmem, size = 0x1000, scoped, tag = 'scratch operand']
  %s0 = inlined_call_operand.vmem [shape: f32[2,8,128], index: 0, kind: input, shape index: {}]
  %s1 = inlined_call_operand.vmem [shape: f32[2,1,8], index: 1, kind: input, shape index: {}]
  %s2 = inlined_call_operand.vmem [shape: f32[1,128], index: 2, kind: input, shape index: {}]
  %s3 = inlined_call_operand.vmem [shape: f32[1,128], index: 3, kind: input, shape index: {}]
  %s4 = inlined_call_operand.hbm [shape: bf16[2,128,384], index: 4, kind: input, shape index: {}]
  %s5 = inlined_call_operand.vmem [shape: f32[2,1,384], index: 5, kind: input, shape index: {}]
  %s6 = inlined_call_operand.vmem [shape: bf16[2,128,128], index: 6, kind: input, shape index: {}]
  %s7 = inlined_call_operand.vmem [shape: f32[2,1,128], index: 7, kind: input, shape index: {}]
  %s8 = inlined_call_operand.vmem [shape: f32[2,1,128], index: 8, kind: input, shape index: {}]
  %s9 = inlined_call_operand.vmem [shape: f32[2,1,128], index: 9, kind: input, shape index: {}]
  %s10 = inlined_call_operand.vmem [shape: bf16[2,128,256], index: 10, kind: input, shape index: {}]
  %s11 = inlined_call_operand.vmem [shape: f32[2,1,256], index: 11, kind: input, shape index: {}]
  %s12 = inlined_call_operand.hbm [shape: bf16[2,256,128], index: 12, kind: input, shape index: {}]
  %s13 = inlined_call_operand.vmem [shape: f32[2,1,128], index: 13, kind: input, shape index: {}]
  %s14 = inlined_call_operand.vmem [shape: f32[2,1,128], index: 14, kind: input, shape index: {}]
  %s15 = inlined_call_operand.vmem [shape: f32[2,1,128], index: 15, kind: input, shape index: {}]
  %s16 = inlined_call_operand.hbm [shape: bf16[128,128], index: 16, kind: input, shape index: {}]
  %s17 = inlined_call_operand.vmem [shape: f32[1,128], index: 17, kind: input, shape index: {}]
  %s18 = inlined_call_operand.hbm [shape: bf16[128,128], index: 18, kind: input, shape index: {}]
  %s19 = inlined_call_operand.vmem [shape: f32[1,128], index: 19, kind: input, shape index: {}]
  %s20 = inlined_call_operand.hbm [shape: bf16[128,128], index: 20, kind: input, shape index: {}]
  %s21 = inlined_call_operand.vmem [shape: f32[1,128], index: 21, kind: input, shape index: {}]
  %s22 = inlined_call_operand.hbm [shape: f32[2,1,128], index: 22, kind: output, shape index: {0}]
  %s23 = inlined_call_operand.hbm [shape: f32[2,1,128], index: 23, kind: output, shape index: {1}]
  %24 = xla_tuple %s22, %s23
  %s25 = sld [smem:[#allocation0]]
  $region157: #{protbert_forward.1} parent=0
    _
  %s27 = ssub.s32 1, %s25
  %s28 = scalar_select 0, %s27, %s25
  $region1: #{protbert_forward.1} parent=0
    #allocation3 [shape = 'u8[196608]{0}', space=vmem, size = 0x30000, scoped, tag = 'input window, operand 4']
    #allocation4 [shape = 's32[2]{0}', space=sflag, size = 0x8, scoped, tag = 'scoped memory for protbert_forward.1']
    #allocation5 [shape = 's32[2]{0}', space=sflag, size = 0x8, scoped, tag = 'scoped memory for protbert_forward.1']
    #allocation6 [shape = 'u8[131072]{0}', space=vmem, size = 0x20000, scoped, tag = 'input window, operand 12']
    #allocation7 [shape = 's32[2]{0}', space=sflag, size = 0x8, scoped, tag = 'scoped memory for protbert_forward.1']
    #allocation8 [shape = 'u8[32768]{0}', space=vmem, size = 0x8000, scoped, tag = 'input window, operand 16, single buffered']
    #allocation9 [shape = 'u8[32768]{0}', space=vmem, size = 0x8000, scoped, tag = 'input window, operand 18, single buffered']
    #allocation10 [shape = 's32[1]{0}', space=sflag, size = 0x4, scoped, tag = 'scoped memory for protbert_forward.1']
    #allocation11 [shape = 'u8[32768]{0}', space=vmem, size = 0x8000, scoped, tag = 'input window, operand 20, single buffered']
    #allocation12 [shape = 'u8[1024]{0}', space=vmem, size = 0x400, scoped, tag = 'output window, operand 0']
    #allocation13 [shape = 'u8[1024]{0}', space=vmem, size = 0x400, scoped, tag = 'output window, operand 1']
    #allocation14 [shape = 's32[2]{0}', space=sflag, size = 0x8, scoped, tag = 'scoped memory for protbert_forward.1']
    %29 = vsyncpa [#allocation4], 0
    %s30 = scalar_lea.sflag [#allocation4], 1
    %31 = vsyncpa %s30, 0
    %32 = vsyncpa [#allocation7], 0
    %s33 = scalar_lea.sflag [#allocation7], 1
    %34 = vsyncpa %s33, 0
    %35 = vsyncpa [#allocation10], 0
    %36 = vsyncpa [#allocation5], 0
    %s37 = scalar_lea.sflag [#allocation5], 1
    %38 = vsyncpa %s37, 0
    %39 = vsyncpa [#allocation14], 0
    %s40 = scalar_lea.sflag [#allocation14], 1
    %41 = vsyncpa %s40, 0
    loop: start=0, step=1, limit=6
    $region2: #{protbert_forward.1} parent=1 // loop_pre_header
      _
    $region3: #{protbert_forward.1} parent=1 // loop_header
      %s43 = sphi 0, %s47
      %p44 = scmp.ge.s32.totalorder %s43, 6
      %s50 = sphi 0, %s62
      %s51 = sphi 0, %s58
      %s52 = sphi 0, %s50
      %s53 = sphi 0, %s51
      %s54 = sphi 0, %s52
      %s55 = sphi 0, %s53
      %s65 = sphi 0, %s67
      %s68 = sphi 0, %s65
      %s69 = sphi 0, %s68
      %s85 = sphi 0, %s69
      %s91 = sphi 0, %s93
      %s94 = sphi 0, %s91
      %s95 = sphi 0, %s94
      %s111 = sphi 0, %s95
      %s115 = sphi 0, %s115
      %s117 = sphi 0, %s115
      %s118 = sphi 0, %s117
      %s132 = sphi 0, %s118
      %s136 = sphi 0, %s136
      %s138 = sphi 0, %s136
      %s139 = sphi 0, %s138
      %s153 = sphi 0, %s139
      %s159 = sphi 0, %s161
      %s162 = sphi 0, %s159
      %s163 = sphi 0, %s162
      %s179 = sphi 0, %s163
      %s185 = sphi 0, %s187
      %s188 = sphi 0, %s185
      %s189 = sphi 0, %s188
      %s205 = sphi 0, %s189
      %s211 = sphi 0, %s213
      %s214 = sphi 0, %s211
      %s215 = sphi 0, %s214
      %s231 = sphi 0, %s215
      %s237 = sphi 0, %s239
      %s240 = sphi 0, %s237
      %s241 = sphi 0, %s240
      %s257 = sphi 0, %s241
      %s263 = sphi 0, %s265
      %s266 = sphi 0, %s263
      %s267 = sphi 0, %s266
      %s283 = sphi 0, %s267
      %s289 = sphi 0, %s291
      %s292 = sphi 0, %s289
      %s293 = sphi 0, %s292
      %s309 = sphi 0, %s293
      %s315 = sphi 0, %s317
      %s318 = sphi 0, %s315
      %s319 = sphi 0, %s318
      %s335 = sphi 0, %s319
      %s341 = sphi 0, %s343
      %s344 = sphi 0, %s341
      %s345 = sphi 0, %s344
      %s361 = sphi 0, %s345
      %s367 = sphi 0, %s369
      %s370 = sphi 0, %s367
      %s371 = sphi 0, %s370
      %s387 = sphi 0, %s371
      %s393 = sphi 0, %s395
      %s396 = sphi 0, %s393
      %s397 = sphi 0, %s396
      %s413 = sphi 0, %s397
      %s419 = sphi 0, %s421
      %s422 = sphi 0, %s419
      %s423 = sphi 0, %s422
      %s439 = sphi 0, %s423
      %s445 = sphi 0, %s447
      %s448 = sphi 0, %s445
      %s449 = sphi 0, %s448
      %s465 = sphi 0, %s449
      %s469 = sphi 0, %s469
      %s471 = sphi 0, %s469
      %s472 = sphi 0, %s471
      %s486 = sphi 0, %s472
      %s490 = sphi 0, %s490
      %s492 = sphi 0, %s490
      %s493 = sphi 0, %s492
      %s507 = sphi 0, %s493
      %s511 = sphi 0, %s511
      %s513 = sphi 0, %s511
      %s514 = sphi 0, %s513
      %s528 = sphi 0, %s514
      %s532 = sphi 0, %s532
      %s534 = sphi 0, %s532
      %s535 = sphi 0, %s534
      %s549 = sphi 0, %s535
      %s553 = sphi 0, %s553
      %s555 = sphi 0, %s553
      %s556 = sphi 0, %s555
      %s570 = sphi 0, %s556
      %s574 = sphi 0, %s574
      %s576 = sphi 0, %s574
      %s577 = sphi 0, %s576
      %s591 = sphi 0, %s577
      %s597 = sphi 0, %s599
      %s600 = sphi 0, %s597
      %s601 = sphi 0, %s600
      %s617 = sphi 0, %s601
      %s623 = sphi 0, %s625
      %s626 = sphi 0, %s623
      %s627 = sphi 0, %s626
      %s643 = sphi 0, %s627
    $region4: #{protbert_forward.1} parent=1 // loop_header_branch
      %46 = sbr.rel (%p44) target = $region8
    $region5: #{protbert_forward.1} parent=1 // loop_body
      %s48 = ssub.s32 %s43, 1
      %s49 = ssub.s32 %s43, 2
      %s56 = sadd.s32 1, %s51
      %p57 = scmp.ge.s32.totalorder %s56, 2
      %s58 = scalar_select %p57, 0, %s56
      %s59 = sadd.s32 1, %s50
      %s60 = scalar_select %p57, %s59, %s50
      %p61 = scmp.ge.s32.totalorder %s60, 2
      %s62 = scalar_select %p61, 0, %s60
      %s63 = ssub.s32 %s50, %s62
      %p64 = scmp.eq.s32.totalorder %s63, 0
      %s66 = sadd.s32 %s65, 1
      %s67 = scalar_select %p64, %s65, %s66
      %p70 = pneg %p64
      %p71 = scmp.eq.s32.totalorder %s43, 3
      %p72 = por %p70, %p71
      %p73 = scmp.ne.s32.totalorder %s65, %s68
      %p74 = scmp.eq.s32.totalorder %s43, 0
      %p75 = por %p73, %p74
      %p76 = scmp.ne.s32.totalorder %s65, %s68
      %p77 = scmp.eq.s32.totalorder %s48, 3
      %p78 = por %p76, %p77
      %p79 = scmp.ne.s32.totalorder %s68, %s69
      %p80 = scmp.eq.s32.totalorder %s48, 0
      %p81 = por %p79, %p80
      %p82 = scmp.ne.s32.totalorder %s68, %s69
      %p83 = scmp.eq.s32.totalorder %s49, 3
      %p84 = por %p82, %p83
      %p86 = scmp.ne.s32.totalorder %s69, %s85
      %p87 = scmp.eq.s32.totalorder %s49, 0
      %p88 = por %p86, %p87
      %s89 = ssub.s32 %s50, %s62
      %p90 = scmp.eq.s32.totalorder %s89, 0
      %s92 = sadd.s32 %s91, 1
      %s93 = scalar_select %p90, %s91, %s92
      %p96 = pneg %p90
      %p97 = scmp.eq.s32.totalorder %s43, 3
      %p98 = por %p96, %p97
      %p99 = scmp.ne.s32.totalorder %s91, %s94
      %p100 = scmp.eq.s32.totalorder %s43, 0
      %p101 = por %p99, %p100
      %p102 = scmp.ne.s32.totalorder %s91, %s94
      %p103 = scmp.eq.s32.totalorder %s48, 3
      %p104 = por %p102, %p103
      %p105 = scmp.ne.s32.totalorder %s94, %s95
      %p106 = scmp.eq.s32.totalorder %s48, 0
      %p107 = por %p105, %p106
      %p108 = scmp.ne.s32.totalorder %s94, %s95
      %p109 = scmp.eq.s32.totalorder %s49, 3
      %p110 = por %p108, %p109
      %p112 = scmp.ne.s32.totalorder %s95, %s111
      %p113 = scmp.eq.s32.totalorder %s49, 0
      %p114 = por %p112, %p113
      %s116 = sadd.s32 %s115, 1
      %p119 = scmp.eq.s32.totalorder %s43, 3
      %p120 = scmp.ne.s32.totalorder %s115, %s117
      %p121 = scmp.eq.s32.totalorder %s43, 0
      %p122 = por %p120, %p121
      %p123 = scmp.ne.s32.totalorder %s115, %s117
      %p124 = scmp.eq.s32.totalorder %s48, 3
      %p125 = por %p123, %p124
      %p126 = scmp.ne.s32.totalorder %s117, %s118
      %p127 = scmp.eq.s32.totalorder %s48, 0
      %p128 = por %p126, %p127
      %p129 = scmp.ne.s32.totalorder %s117, %s118
      %p130 = scmp.eq.s32.totalorder %s49, 3
      %p131 = por %p129, %p130
      %p133 = scmp.ne.s32.totalorder %s118, %s132
      %p134 = scmp.eq.s32.totalorder %s49, 0
      %p135 = por %p133, %p134
      %s137 = sadd.s32 %s136, 1
      %p140 = scmp.eq.s32.totalorder %s43, 3
      %p141 = scmp.ne.s32.totalorder %s136, %s138
      %p142 = scmp.eq.s32.totalorder %s43, 0
      %p143 = por %p141, %p142
      %p144 = scmp.ne.s32.totalorder %s136, %s138
      %p145 = scmp.eq.s32.totalorder %s48, 3
      %p146 = por %p144, %p145
      %p147 = scmp.ne.s32.totalorder %s138, %s139
      %p148 = scmp.eq.s32.totalorder %s48, 0
      %p149 = por %p147, %p148
      %p150 = scmp.ne.s32.totalorder %s138, %s139
      %p151 = scmp.eq.s32.totalorder %s49, 3
      %p152 = por %p150, %p151
      %p154 = scmp.ne.s32.totalorder %s139, %s153
      %p155 = scmp.eq.s32.totalorder %s49, 0
      %p156 = por %p154, %p155
      %s157 = ssub.s32 %s51, %s58
      %p158 = scmp.eq.s32.totalorder %s157, 0
      %s160 = sadd.s32 %s159, 1
      %s161 = scalar_select %p158, %s159, %s160
      %p164 = pneg %p158
      %p165 = scmp.eq.s32.totalorder %s43, 3
      %p166 = por %p164, %p165
      %p167 = scmp.ne.s32.totalorder %s159, %s162
      %p168 = scmp.eq.s32.totalorder %s43, 0
      %p169 = por %p167, %p168
      %p170 = scmp.ne.s32.totalorder %s159, %s162
      %p171 = scmp.eq.s32.totalorder %s48, 3
      %p172 = por %p170, %p171
      %p173 = scmp.ne.s32.totalorder %s162, %s163
      %p174 = scmp.eq.s32.totalorder %s48, 0
      %p175 = por %p173, %p174
      %p176 = scmp.ne.s32.totalorder %s162, %s163
      %p177 = scmp.eq.s32.totalorder %s49, 3
      %p178 = por %p176, %p177
      %p180 = scmp.ne.s32.totalorder %s163, %s179
      %p181 = scmp.eq.s32.totalorder %s49, 0
      %p182 = por %p180, %p181
      %s183 = ssub.s32 %s51, %s58
      %p184 = scmp.eq.s32.totalorder %s183, 0
      %s186 = sadd.s32 %s185, 1
      %s187 = scalar_select %p184, %s185, %s186
      %p190 = pneg %p184
      %p191 = scmp.eq.s32.totalorder %s43, 3
      %p192 = por %p190, %p191
      %p193 = scmp.ne.s32.totalorder %s185, %s188
      %p194 = scmp.eq.s32.totalorder %s43, 0
      %p195 = por %p193, %p194
      %p196 = scmp.ne.s32.totalorder %s185, %s188
      %p197 = scmp.eq.s32.totalorder %s48, 3
      %p198 = por %p196, %p197
      %p199 = scmp.ne.s32.totalorder %s188, %s189
      %p200 = scmp.eq.s32.totalorder %s48, 0
      %p201 = por %p199, %p200
      %p202 = scmp.ne.s32.totalorder %s188, %s189
      %p203 = scmp.eq.s32.totalorder %s49, 3
      %p204 = por %p202, %p203
      %p206 = scmp.ne.s32.totalorder %s189, %s205
      %p207 = scmp.eq.s32.totalorder %s49, 0
      %p208 = por %p206, %p207
      %s209 = ssub.s32 %s51, %s58
      %p210 = scmp.eq.s32.totalorder %s209, 0
      %s212 = sadd.s32 %s211, 1
      %s213 = scalar_select %p210, %s211, %s212
      %p216 = pneg %p210
      %p217 = scmp.eq.s32.totalorder %s43, 3
      %p218 = por %p216, %p217
      %p219 = scmp.ne.s32.totalorder %s211, %s214
      %p220 = scmp.eq.s32.totalorder %s43, 0
      %p221 = por %p219, %p220
      %p222 = scmp.ne.s32.totalorder %s211, %s214
      %p223 = scmp.eq.s32.totalorder %s48, 3
      %p224 = por %p222, %p223
      %p225 = scmp.ne.s32.totalorder %s214, %s215
      %p226 = scmp.eq.s32.totalorder %s48, 0
      %p227 = por %p225, %p226
      %p228 = scmp.ne.s32.totalorder %s214, %s215
      %p229 = scmp.eq.s32.totalorder %s49, 3
      %p230 = por %p228, %p229
      %p232 = scmp.ne.s32.totalorder %s215, %s231
      %p233 = scmp.eq.s32.totalorder %s49, 0
      %p234 = por %p232, %p233
      %s235 = ssub.s32 %s51, %s58
      %p236 = scmp.eq.s32.totalorder %s235, 0
      %s238 = sadd.s32 %s237, 1
      %s239 = scalar_select %p236, %s237, %s238
      %p242 = pneg %p236
      %p243 = scmp.eq.s32.totalorder %s43, 3
      %p244 = por %p242, %p243
      %p245 = scmp.ne.s32.totalorder %s237, %s240
      %p246 = scmp.eq.s32.totalorder %s43, 0
      %p247 = por %p245, %p246
      %p248 = scmp.ne.s32.totalorder %s237, %s240
      %p249 = scmp.eq.s32.totalorder %s48, 3
      %p250 = por %p248, %p249
      %p251 = scmp.ne.s32.totalorder %s240, %s241
      %p252 = scmp.eq.s32.totalorder %s48, 0
      %p253 = por %p251, %p252
      %p254 = scmp.ne.s32.totalorder %s240, %s241
      %p255 = scmp.eq.s32.totalorder %s49, 3
      %p256 = por %p254, %p255
      %p258 = scmp.ne.s32.totalorder %s241, %s257
      %p259 = scmp.eq.s32.totalorder %s49, 0
      %p260 = por %p258, %p259
      %s261 = ssub.s32 %s51, %s58
      %p262 = scmp.eq.s32.totalorder %s261, 0
      %s264 = sadd.s32 %s263, 1
      %s265 = scalar_select %p262, %s263, %s264
      %p268 = pneg %p262
      %p269 = scmp.eq.s32.totalorder %s43, 3
      %p270 = por %p268, %p269
      %p271 = scmp.ne.s32.totalorder %s263, %s266
      %p272 = scmp.eq.s32.totalorder %s43, 0
      %p273 = por %p271, %p272
      %p274 = scmp.ne.s32.totalorder %s263, %s266
      %p275 = scmp.eq.s32.totalorder %s48, 3
      %p276 = por %p274, %p275
      %p277 = scmp.ne.s32.totalorder %s266, %s267
      %p278 = scmp.eq.s32.totalorder %s48, 0
      %p279 = por %p277, %p278
      %p280 = scmp.ne.s32.totalorder %s266, %s267
      %p281 = scmp.eq.s32.totalorder %s49, 3
      %p282 = por %p280, %p281
      %p284 = scmp.ne.s32.totalorder %s267, %s283
      %p285 = scmp.eq.s32.totalorder %s49, 0
      %p286 = por %p284, %p285
      %s287 = ssub.s32 %s51, %s58
      %p288 = scmp.eq.s32.totalorder %s287, 0
      %s290 = sadd.s32 %s289, 1
      %s291 = scalar_select %p288, %s289, %s290
      %p294 = pneg %p288
      %p295 = scmp.eq.s32.totalorder %s43, 3
      %p296 = por %p294, %p295
      %p297 = scmp.ne.s32.totalorder %s289, %s292
      %p298 = scmp.eq.s32.totalorder %s43, 0
      %p299 = por %p297, %p298
      %p300 = scmp.ne.s32.totalorder %s289, %s292
      %p301 = scmp.eq.s32.totalorder %s48, 3
      %p302 = por %p300, %p301
      %p303 = scmp.ne.s32.totalorder %s292, %s293
      %p304 = scmp.eq.s32.totalorder %s48, 0
      %p305 = por %p303, %p304
      %p306 = scmp.ne.s32.totalorder %s292, %s293
      %p307 = scmp.eq.s32.totalorder %s49, 3
      %p308 = por %p306, %p307
      %p310 = scmp.ne.s32.totalorder %s293, %s309
      %p311 = scmp.eq.s32.totalorder %s49, 0
      %p312 = por %p310, %p311
      %s313 = ssub.s32 %s51, %s58
      %p314 = scmp.eq.s32.totalorder %s313, 0
      %s316 = sadd.s32 %s315, 1
      %s317 = scalar_select %p314, %s315, %s316
      %p320 = pneg %p314
      %p321 = scmp.eq.s32.totalorder %s43, 3
      %p322 = por %p320, %p321
      %p323 = scmp.ne.s32.totalorder %s315, %s318
      %p324 = scmp.eq.s32.totalorder %s43, 0
      %p325 = por %p323, %p324
      %p326 = scmp.ne.s32.totalorder %s315, %s318
      %p327 = scmp.eq.s32.totalorder %s48, 3
      %p328 = por %p326, %p327
      %p329 = scmp.ne.s32.totalorder %s318, %s319
      %p330 = scmp.eq.s32.totalorder %s48, 0
      %p331 = por %p329, %p330
      %p332 = scmp.ne.s32.totalorder %s318, %s319
      %p333 = scmp.eq.s32.totalorder %s49, 3
      %p334 = por %p332, %p333
      %p336 = scmp.ne.s32.totalorder %s319, %s335
      %p337 = scmp.eq.s32.totalorder %s49, 0
      %p338 = por %p336, %p337
      %s339 = ssub.s32 %s51, %s58
      %p340 = scmp.eq.s32.totalorder %s339, 0
      %s342 = sadd.s32 %s341, 1
      %s343 = scalar_select %p340, %s341, %s342
      %p346 = pneg %p340
      %p347 = scmp.eq.s32.totalorder %s43, 3
      %p348 = por %p346, %p347
      %p349 = scmp.ne.s32.totalorder %s341, %s344
      %p350 = scmp.eq.s32.totalorder %s43, 0
      %p351 = por %p349, %p350
      %p352 = scmp.ne.s32.totalorder %s341, %s344
      %p353 = scmp.eq.s32.totalorder %s48, 3
      %p354 = por %p352, %p353
      %p355 = scmp.ne.s32.totalorder %s344, %s345
      %p356 = scmp.eq.s32.totalorder %s48, 0
      %p357 = por %p355, %p356
      %p358 = scmp.ne.s32.totalorder %s344, %s345
      %p359 = scmp.eq.s32.totalorder %s49, 3
      %p360 = por %p358, %p359
      %p362 = scmp.ne.s32.totalorder %s345, %s361
      %p363 = scmp.eq.s32.totalorder %s49, 0
      %p364 = por %p362, %p363
      %s365 = ssub.s32 %s51, %s58
      %p366 = scmp.eq.s32.totalorder %s365, 0
      %s368 = sadd.s32 %s367, 1
      %s369 = scalar_select %p366, %s367, %s368
      %p372 = pneg %p366
      %p373 = scmp.eq.s32.totalorder %s43, 3
      %p374 = por %p372, %p373
      %p375 = scmp.ne.s32.totalorder %s367, %s370
      %p376 = scmp.eq.s32.totalorder %s43, 0
      %p377 = por %p375, %p376
      %p378 = scmp.ne.s32.totalorder %s367, %s370
      %p379 = scmp.eq.s32.totalorder %s48, 3
      %p380 = por %p378, %p379
      %p381 = scmp.ne.s32.totalorder %s370, %s371
      %p382 = scmp.eq.s32.totalorder %s48, 0
      %p383 = por %p381, %p382
      %p384 = scmp.ne.s32.totalorder %s370, %s371
      %p385 = scmp.eq.s32.totalorder %s49, 3
      %p386 = por %p384, %p385
      %p388 = scmp.ne.s32.totalorder %s371, %s387
      %p389 = scmp.eq.s32.totalorder %s49, 0
      %p390 = por %p388, %p389
      %s391 = ssub.s32 %s51, %s58
      %p392 = scmp.eq.s32.totalorder %s391, 0
      %s394 = sadd.s32 %s393, 1
      %s395 = scalar_select %p392, %s393, %s394
      %p398 = pneg %p392
      %p399 = scmp.eq.s32.totalorder %s43, 3
      %p400 = por %p398, %p399
      %p401 = scmp.ne.s32.totalorder %s393, %s396
      %p402 = scmp.eq.s32.totalorder %s43, 0
      %p403 = por %p401, %p402
      %p404 = scmp.ne.s32.totalorder %s393, %s396
      %p405 = scmp.eq.s32.totalorder %s48, 3
      %p406 = por %p404, %p405
      %p407 = scmp.ne.s32.totalorder %s396, %s397
      %p408 = scmp.eq.s32.totalorder %s48, 0
      %p409 = por %p407, %p408
      %p410 = scmp.ne.s32.totalorder %s396, %s397
      %p411 = scmp.eq.s32.totalorder %s49, 3
      %p412 = por %p410, %p411
      %p414 = scmp.ne.s32.totalorder %s397, %s413
      %p415 = scmp.eq.s32.totalorder %s49, 0
      %p416 = por %p414, %p415
      %s417 = ssub.s32 %s51, %s58
      %p418 = scmp.eq.s32.totalorder %s417, 0
      %s420 = sadd.s32 %s419, 1
      %s421 = scalar_select %p418, %s419, %s420
      %p424 = pneg %p418
      %p425 = scmp.eq.s32.totalorder %s43, 3
      %p426 = por %p424, %p425
      %p427 = scmp.ne.s32.totalorder %s419, %s422
      %p428 = scmp.eq.s32.totalorder %s43, 0
      %p429 = por %p427, %p428
      %p430 = scmp.ne.s32.totalorder %s419, %s422
      %p431 = scmp.eq.s32.totalorder %s48, 3
      %p432 = por %p430, %p431
      %p433 = scmp.ne.s32.totalorder %s422, %s423
      %p434 = scmp.eq.s32.totalorder %s48, 0
      %p435 = por %p433, %p434
      %p436 = scmp.ne.s32.totalorder %s422, %s423
      %p437 = scmp.eq.s32.totalorder %s49, 3
      %p438 = por %p436, %p437
      %p440 = scmp.ne.s32.totalorder %s423, %s439
      %p441 = scmp.eq.s32.totalorder %s49, 0
      %p442 = por %p440, %p441
      %s443 = ssub.s32 %s51, %s58
      %p444 = scmp.eq.s32.totalorder %s443, 0
      %s446 = sadd.s32 %s445, 1
      %s447 = scalar_select %p444, %s445, %s446
      %p450 = pneg %p444
      %p451 = scmp.eq.s32.totalorder %s43, 3
      %p452 = por %p450, %p451
      %p453 = scmp.ne.s32.totalorder %s445, %s448
      %p454 = scmp.eq.s32.totalorder %s43, 0
      %p455 = por %p453, %p454
      %p456 = scmp.ne.s32.totalorder %s445, %s448
      %p457 = scmp.eq.s32.totalorder %s48, 3
      %p458 = por %p456, %p457
      %p459 = scmp.ne.s32.totalorder %s448, %s449
      %p460 = scmp.eq.s32.totalorder %s48, 0
      %p461 = por %p459, %p460
      %p462 = scmp.ne.s32.totalorder %s448, %s449
      %p463 = scmp.eq.s32.totalorder %s49, 3
      %p464 = por %p462, %p463
      %p466 = scmp.ne.s32.totalorder %s449, %s465
      %p467 = scmp.eq.s32.totalorder %s49, 0
      %p468 = por %p466, %p467
      %s470 = sadd.s32 %s469, 1
      %p473 = scmp.eq.s32.totalorder %s43, 3
      %p474 = scmp.ne.s32.totalorder %s469, %s471
      %p475 = scmp.eq.s32.totalorder %s43, 0
      %p476 = por %p474, %p475
      %p477 = scmp.ne.s32.totalorder %s469, %s471
      %p478 = scmp.eq.s32.totalorder %s48, 3
      %p479 = por %p477, %p478
      %p480 = scmp.ne.s32.totalorder %s471, %s472
      %p481 = scmp.eq.s32.totalorder %s48, 0
      %p482 = por %p480, %p481
      %p483 = scmp.ne.s32.totalorder %s471, %s472
      %p484 = scmp.eq.s32.totalorder %s49, 3
      %p485 = por %p483, %p484
      %p487 = scmp.ne.s32.totalorder %s472, %s486
      %p488 = scmp.eq.s32.totalorder %s49, 0
      %p489 = por %p487, %p488
      %s491 = sadd.s32 %s490, 1
      %p494 = scmp.eq.s32.totalorder %s43, 3
      %p495 = scmp.ne.s32.totalorder %s490, %s492
      %p496 = scmp.eq.s32.totalorder %s43, 0
      %p497 = por %p495, %p496
      %p498 = scmp.ne.s32.totalorder %s490, %s492
      %p499 = scmp.eq.s32.totalorder %s48, 3
      %p500 = por %p498, %p499
      %p501 = scmp.ne.s32.totalorder %s492, %s493
      %p502 = scmp.eq.s32.totalorder %s48, 0
      %p503 = por %p501, %p502
      %p504 = scmp.ne.s32.totalorder %s492, %s493
      %p505 = scmp.eq.s32.totalorder %s49, 3
      %p506 = por %p504, %p505
      %p508 = scmp.ne.s32.totalorder %s493, %s507
      %p509 = scmp.eq.s32.totalorder %s49, 0
      %p510 = por %p508, %p509
      %s512 = sadd.s32 %s511, 1
      %p515 = scmp.eq.s32.totalorder %s43, 3
      %p516 = scmp.ne.s32.totalorder %s511, %s513
      %p517 = scmp.eq.s32.totalorder %s43, 0
      %p518 = por %p516, %p517
      %p519 = scmp.ne.s32.totalorder %s511, %s513
      %p520 = scmp.eq.s32.totalorder %s48, 3
      %p521 = por %p519, %p520
      %p522 = scmp.ne.s32.totalorder %s513, %s514
      %p523 = scmp.eq.s32.totalorder %s48, 0
      %p524 = por %p522, %p523
      %p525 = scmp.ne.s32.totalorder %s513, %s514
      %p526 = scmp.eq.s32.totalorder %s49, 3
      %p527 = por %p525, %p526
      %p529 = scmp.ne.s32.totalorder %s514, %s528
      %p530 = scmp.eq.s32.totalorder %s49, 0
      %p531 = por %p529, %p530
      %s533 = sadd.s32 %s532, 1
      %p536 = scmp.eq.s32.totalorder %s43, 3
      %p537 = scmp.ne.s32.totalorder %s532, %s534
      %p538 = scmp.eq.s32.totalorder %s43, 0
      %p539 = por %p537, %p538
      %p540 = scmp.ne.s32.totalorder %s532, %s534
      %p541 = scmp.eq.s32.totalorder %s48, 3
      %p542 = por %p540, %p541
      %p543 = scmp.ne.s32.totalorder %s534, %s535
      %p544 = scmp.eq.s32.totalorder %s48, 0
      %p545 = por %p543, %p544
      %p546 = scmp.ne.s32.totalorder %s534, %s535
      %p547 = scmp.eq.s32.totalorder %s49, 3
      %p548 = por %p546, %p547
      %p550 = scmp.ne.s32.totalorder %s535, %s549
      %p551 = scmp.eq.s32.totalorder %s49, 0
      %p552 = por %p550, %p551
      %s554 = sadd.s32 %s553, 1
      %p557 = scmp.eq.s32.totalorder %s43, 3
      %p558 = scmp.ne.s32.totalorder %s553, %s555
      %p559 = scmp.eq.s32.totalorder %s43, 0
      %p560 = por %p558, %p559
      %p561 = scmp.ne.s32.totalorder %s553, %s555
      %p562 = scmp.eq.s32.totalorder %s48, 3
      %p563 = por %p561, %p562
      %p564 = scmp.ne.s32.totalorder %s555, %s556
      %p565 = scmp.eq.s32.totalorder %s48, 0
      %p566 = por %p564, %p565
      %p567 = scmp.ne.s32.totalorder %s555, %s556
      %p568 = scmp.eq.s32.totalorder %s49, 3
      %p569 = por %p567, %p568
      %p571 = scmp.ne.s32.totalorder %s556, %s570
      %p572 = scmp.eq.s32.totalorder %s49, 0
      %p573 = por %p571, %p572
      %s575 = sadd.s32 %s574, 1
      %p578 = scmp.eq.s32.totalorder %s43, 3
      %p579 = scmp.ne.s32.totalorder %s574, %s576
      %p580 = scmp.eq.s32.totalorder %s43, 0
      %p581 = por %p579, %p580
      %p582 = scmp.ne.s32.totalorder %s574, %s576
      %p583 = scmp.eq.s32.totalorder %s48, 3
      %p584 = por %p582, %p583
      %p585 = scmp.ne.s32.totalorder %s576, %s577
      %p586 = scmp.eq.s32.totalorder %s48, 0
      %p587 = por %p585, %p586
      %p588 = scmp.ne.s32.totalorder %s576, %s577
      %p589 = scmp.eq.s32.totalorder %s49, 3
      %p590 = por %p588, %p589
      %p592 = scmp.ne.s32.totalorder %s577, %s591
      %p593 = scmp.eq.s32.totalorder %s49, 0
      %p594 = por %p592, %p593
      %s595 = ssub.s32 %s50, %s62
      %p596 = scmp.eq.s32.totalorder %s595, 0
      %s598 = sadd.s32 %s597, 1
      %s599 = scalar_select %p596, %s597, %s598
      %p602 = pneg %p596
      %p603 = scmp.eq.s32.totalorder %s43, 3
      %p604 = por %p602, %p603
      %p605 = scmp.ne.s32.totalorder %s597, %s600
      %p606 = scmp.eq.s32.totalorder %s43, 0
      %p607 = por %p605, %p606
      %p608 = scmp.ne.s32.totalorder %s597, %s600
      %p609 = scmp.eq.s32.totalorder %s48, 3
      %p610 = por %p608, %p609
      %p611 = scmp.ne.s32.totalorder %s600, %s601
      %p612 = scmp.eq.s32.totalorder %s48, 0
      %p613 = por %p611, %p612
      %p614 = scmp.ne.s32.totalorder %s600, %s601
      %p615 = scmp.eq.s32.totalorder %s49, 3
      %p616 = por %p614, %p615
      %p618 = scmp.ne.s32.totalorder %s601, %s617
      %p619 = scmp.eq.s32.totalorder %s49, 0
      %p620 = por %p618, %p619
      %s621 = ssub.s32 %s50, %s62
      %p622 = scmp.eq.s32.totalorder %s621, 0
      %s624 = sadd.s32 %s623, 1
      %s625 = scalar_select %p622, %s623, %s624
      %p628 = pneg %p622
      %p629 = scmp.eq.s32.totalorder %s43, 3
      %p630 = por %p628, %p629
      %p631 = scmp.ne.s32.totalorder %s623, %s626
      %p632 = scmp.eq.s32.totalorder %s43, 0
      %p633 = por %p631, %p632
      %p634 = scmp.ne.s32.totalorder %s623, %s626
      %p635 = scmp.eq.s32.totalorder %s48, 3
      %p636 = por %p634, %p635
      %p637 = scmp.ne.s32.totalorder %s626, %s627
      %p638 = scmp.eq.s32.totalorder %s48, 0
      %p639 = por %p637, %p638
      %p640 = scmp.ne.s32.totalorder %s626, %s627
      %p641 = scmp.eq.s32.totalorder %s49, 3
      %p642 = por %p640, %p641
      %p644 = scmp.ne.s32.totalorder %s627, %s643
      %p645 = scmp.eq.s32.totalorder %s49, 0
      %p646 = por %p644, %p645
      %p647 = scmp.le.s32.totalorder 1, %s43
      %p648 = scmp.lt.s32.totalorder %s43, 5
      %p649 = pnand %p647, %p648
      %p650 = pneg %p649
      // Predicated region
      $region9: #{protbert_forward.1} parent=5 // pred_check
        _
      $region10: #{protbert_forward.1} parent=5 // pred_check_branch
        %652 = sbr.rel (%p649) target = $region12
      $region11: #{protbert_forward.1} parent=5 // pred_region
        %s653 = ssub.s32 %s43, 1
        // Predicated region
        $region13: #{protbert_forward.1} parent=11 // pred_check
          %p654 = pneg %p128
        $region14: #{protbert_forward.1} parent=11 // pred_check_branch
          %656 = sbr.rel (%p654) target = $region16
        $region15: #{protbert_forward.1} parent=11 // pred_region
          _
        $region16: #{protbert_forward.1} parent=11 // pred_fallthru
          _
        // Predicated region
        $region17: #{protbert_forward.1} parent=11 // pred_check
          %p657 = pneg %p149
        $region18: #{protbert_forward.1} parent=11 // pred_check_branch
          %659 = sbr.rel (%p657) target = $region20
        $region19: #{protbert_forward.1} parent=11 // pred_region
          _
        $region20: #{protbert_forward.1} parent=11 // pred_fallthru
          _
        // Predicated region
        $region21: #{protbert_forward.1} parent=11 // pred_check
          %p660 = pneg %p482
        $region22: #{protbert_forward.1} parent=11 // pred_check_branch
          %662 = sbr.rel (%p660) target = $region24
        $region23: #{protbert_forward.1} parent=11 // pred_region
          %664 = vsyncadd [#allocation7], 0
          %s665 = sshll.u32 %s16, 4
          %s666 = int_to_ptr.hbm [resolvable:$true] %s665
          %s667 = sshll.u32 [#allocation8], 4
          %s668 = int_to_ptr.vmem [resolvable:$true] %s667
          %673 = dma.hbm_to_vmem [thread:$0]  %s666, 1024, %s668, [#allocation7], 64, 64, 4
        $region24: #{protbert_forward.1} parent=11 // pred_fallthru
          _
        // Predicated region
        $region25: #{protbert_forward.1} parent=11 // pred_check
          %p674 = pneg %p503
        $region26: #{protbert_forward.1} parent=11 // pred_check_branch
          %676 = sbr.rel (%p674) target = $region28
        $region27: #{protbert_forward.1} parent=11 // pred_region
          _
        $region28: #{protbert_forward.1} parent=11 // pred_fallthru
          _
        // Predicated region
        $region29: #{protbert_forward.1} parent=11 // pred_check
          %p677 = pneg %p524
        $region30: #{protbert_forward.1} parent=11 // pred_check_branch
          %679 = sbr.rel (%p677) target = $region32
        $region31: #{protbert_forward.1} parent=11 // pred_region
          %681 = vsyncadd [#allocation10], 0
          %s682 = sshll.u32 %s18, 4
          %s683 = int_to_ptr.hbm [resolvable:$true] %s682
          %s684 = sshll.u32 [#allocation9], 4
          %s685 = int_to_ptr.vmem [resolvable:$true] %s684
          %690 = dma.hbm_to_vmem [thread:$0]  %s683, 1024, %s685, [#allocation10], 64, 64, 4
        $region32: #{protbert_forward.1} parent=11 // pred_fallthru
          _
        // Predicated region
        $region33: #{protbert_forward.1} parent=11 // pred_check
          %p691 = pneg %p545
        $region34: #{protbert_forward.1} parent=11 // pred_check_branch
          %693 = sbr.rel (%p691) target = $region36
        $region35: #{protbert_forward.1} parent=11 // pred_region
          _
        $region36: #{protbert_forward.1} parent=11 // pred_fallthru
          _
        // Predicated region
        $region37: #{protbert_forward.1} parent=11 // pred_check
          %p694 = pneg %p566
        $region38: #{protbert_forward.1} parent=11 // pred_check_branch
          %696 = sbr.rel (%p694) target = $region40
        $region39: #{protbert_forward.1} parent=11 // pred_region
          %698 = vsyncadd [#allocation10], 0
          %s699 = sshll.u32 %s20, 4
          %s700 = int_to_ptr.hbm [resolvable:$true] %s699
          %s701 = sshll.u32 [#allocation11], 4
          %s702 = int_to_ptr.vmem [resolvable:$true] %s701
          %707 = dma.hbm_to_vmem [thread:$0]  %s700, 1024, %s702, [#allocation10], 64, 64, 4
        $region40: #{protbert_forward.1} parent=11 // pred_fallthru
          _
        // Predicated region
        $region41: #{protbert_forward.1} parent=11 // pred_check
          %p708 = pneg %p587
        $region42: #{protbert_forward.1} parent=11 // pred_check_branch
          %710 = sbr.rel (%p708) target = $region44
        $region43: #{protbert_forward.1} parent=11 // pred_region
          _
        $region44: #{protbert_forward.1} parent=11 // pred_fallthru
          _
      $region12: #{protbert_forward.1} parent=5 // pred_fallthru
        _
      %p711 = scmp.lt.s32.totalorder %s43, 4
      // Predicated region
      $region45: #{protbert_forward.1} parent=5 // pred_check
        %p712 = pneg %p711
      $region46: #{protbert_forward.1} parent=5 // pred_check_branch
        %714 = sbr.rel (%p712) target = $region48
      $region47: #{protbert_forward.1} parent=5 // pred_region
        // Predicated region
        $region49: #{protbert_forward.1} parent=47 // pred_check
          %p715 = pneg %p75
        $region50: #{protbert_forward.1} parent=47 // pred_check_branch
          %717 = sbr.rel (%p715) target = $region52
        $region51: #{protbert_forward.1} parent=47 // pred_region
          %p718 = scmp.lt.s32.totalorder %s50, 1
          %s719 = scalar_select %p718, %s50, 1
          %s720 = smul.addr %s719, 8
          %s721 = scalar_lea.vmem %s0, %s720
        $region52: #{protbert_forward.1} parent=47 // pred_fallthru
          _
        // Predicated region
        $region53: #{protbert_forward.1} parent=47 // pred_check
          %p722 = pneg %p101
        $region54: #{protbert_forward.1} parent=47 // pred_check_branch
          %724 = sbr.rel (%p722) target = $region56
        $region55: #{protbert_forward.1} parent=47 // pred_region
          %p725 = scmp.lt.s32.totalorder %s50, 1
          %s726 = scalar_select %p725, %s50, 1
          %s727 = scalar_lea.vmem %s1, %s726
        $region56: #{protbert_forward.1} parent=47 // pred_fallthru
          _
        // Predicated region
        $region57: #{protbert_forward.1} parent=47 // pred_check
          %p728 = pneg %p169
        $region58: #{protbert_forward.1} parent=47 // pred_check_branch
          %730 = sbr.rel (%p728) target = $region60
        $region59: #{protbert_forward.1} parent=47 // pred_region
          %s731 = sand.u32 %s159, 1
          %s732 = scalar_lea.sflag [#allocation4], %s731
          %s733 = sand.u32 %s159, 1
          %s734 = smul.addr %s733, 192
          %s735 = scalar_lea.vmem [#allocation3], %s734
          %737 = vsyncadd %s732, 0
          %s738 = smul.addr %s51, 48
          %s739 = smul.addr %s738, 4
          %s740 = scalar_lea.hbm %s4, %s739
          %s741 = sshll.u32 %s740, 4
          %s742 = int_to_ptr.hbm [resolvable:$true] %s741
          %s743 = sshll.u32 %s735, 4
          %s744 = int_to_ptr.vmem [resolvable:$true] %s743
          %749 = dma.hbm_to_vmem [thread:$0]  %s742, 3072, %s744, %s732, 192, 192, 12
        $region60: #{protbert_forward.1} parent=47 // pred_fallthru
          _
        // Predicated region
        $region61: #{protbert_forward.1} parent=47 // pred_check
          %p750 = pneg %p195
        $region62: #{protbert_forward.1} parent=47 // pred_check_branch
          %752 = sbr.rel (%p750) target = $region64
        $region63: #{protbert_forward.1} parent=47 // pred_region
          %p753 = scmp.lt.s32.totalorder %s51, 1
          %s754 = scalar_select %p753, %s51, 1
          %s755 = smul.addr %s754, 3
          %s756 = scalar_lea.vmem %s5, %s755
        $region64: #{protbert_forward.1} parent=47 // pred_fallthru
          _
        // Predicated region
        $region65: #{protbert_forward.1} parent=47 // pred_check
          %p757 = pneg %p221
        $region66: #{protbert_forward.1} parent=47 // pred_check_branch
          %759 = sbr.rel (%p757) target = $region68
        $region67: #{protbert_forward.1} parent=47 // pred_region
          %p760 = scmp.lt.s32.totalorder %s51, 1
          %s761 = scalar_select %p760, %s51, 1
          %s762 = smul.addr %s761, 16
          %s763 = smul.addr %s762, 4
          %s764 = scalar_lea.vmem %s6, %s763
        $region68: #{protbert_forward.1} parent=47 // pred_fallthru
          _
        // Predicated region
        $region69: #{protbert_forward.1} parent=47 // pred_check
          %p765 = pneg %p247
        $region70: #{protbert_forward.1} parent=47 // pred_check_branch
          %767 = sbr.rel (%p765) target = $region72
        $region71: #{protbert_forward.1} parent=47 // pred_region
          %p768 = scmp.lt.s32.totalorder %s51, 1
          %s769 = scalar_select %p768, %s51, 1
          %s770 = scalar_lea.vmem %s7, %s769
        $region72: #{protbert_forward.1} parent=47 // pred_fallthru
          _
        // Predicated region
        $region73: #{protbert_forward.1} parent=47 // pred_check
          %p771 = pneg %p273
        $region74: #{protbert_forward.1} parent=47 // pred_check_branch
          %773 = sbr.rel (%p771) target = $region76
        $region75: #{protbert_forward.1} parent=47 // pred_region
          %p774 = scmp.lt.s32.totalorder %s51, 1
          %s775 = scalar_select %p774, %s51, 1
          %s776 = scalar_lea.vmem %s8, %s775
        $region76: #{protbert_forward.1} parent=47 // pred_fallthru
          _
        // Predicated region
        $region77: #{protbert_forward.1} parent=47 // pred_check
          %p777 = pneg %p299
        $region78: #{protbert_forward.1} parent=47 // pred_check_branch
          %779 = sbr.rel (%p777) target = $region80
        $region79: #{protbert_forward.1} parent=47 // pred_region
          %p780 = scmp.lt.s32.totalorder %s51, 1
          %s781 = scalar_select %p780, %s51, 1
          %s782 = scalar_lea.vmem %s9, %s781
        $region80: #{protbert_forward.1} parent=47 // pred_fallthru
          _
        // Predicated region
        $region81: #{protbert_forward.1} parent=47 // pred_check
          %p783 = pneg %p325
        $region82: #{protbert_forward.1} parent=47 // pred_check_branch
          %785 = sbr.rel (%p783) target = $region84
        $region83: #{protbert_forward.1} parent=47 // pred_region
          %p786 = scmp.lt.s32.totalorder %s51, 1
          %s787 = scalar_select %p786, %s51, 1
          %s788 = smul.addr %s787, 32
          %s789 = smul.addr %s788, 4
          %s790 = scalar_lea.vmem %s10, %s789
        $region84: #{protbert_forward.1} parent=47 // pred_fallthru
          _
        // Predicated region
        $region85: #{protbert_forward.1} parent=47 // pred_check
          %p791 = pneg %p351
        $region86: #{protbert_forward.1} parent=47 // pred_check_branch
          %793 = sbr.rel (%p791) target = $region88
        $region87: #{protbert_forward.1} parent=47 // pred_region
          %p794 = scmp.lt.s32.totalorder %s51, 1
          %s795 = scalar_select %p794, %s51, 1
          %s796 = smul.addr %s795, 2
          %s797 = scalar_lea.vmem %s11, %s796
        $region88: #{protbert_forward.1} parent=47 // pred_fallthru
          _
        // Predicated region
        $region89: #{protbert_forward.1} parent=47 // pred_check
          %p798 = pneg %p377
        $region90: #{protbert_forward.1} parent=47 // pred_check_branch
          %800 = sbr.rel (%p798) target = $region92
        $region91: #{protbert_forward.1} parent=47 // pred_region
          %s801 = sand.u32 %s43, 1
          %s802 = scalar_lea.sflag [#allocation7], %s801
          %s803 = sand.u32 %s367, 1
          %s804 = smul.addr %s803, 128
          %s805 = scalar_lea.vmem [#allocation6], %s804
          %807 = vsyncadd %s802, 0
          %s808 = smul.addr %s51, 32
          %s809 = smul.addr %s808, 4
          %s810 = scalar_lea.hbm %s12, %s809
          %s811 = sshll.u32 %s810, 4
          %s812 = int_to_ptr.hbm [resolvable:$true] %s811
          %s813 = sshll.u32 %s805, 4
          %s814 = int_to_ptr.vmem [resolvable:$true] %s813
          %819 = dma.hbm_to_vmem [thread:$0]  %s812, 2048, %s814, %s802, 64, 64, 4
        $region92: #{protbert_forward.1} parent=47 // pred_fallthru
          _
        // Predicated region
        $region93: #{protbert_forward.1} parent=47 // pred_check
          %p820 = pneg %p403
        $region94: #{protbert_forward.1} parent=47 // pred_check_branch
          %822 = sbr.rel (%p820) target = $region96
        $region95: #{protbert_forward.1} parent=47 // pred_region
          %p823 = scmp.lt.s32.totalorder %s51, 1
          %s824 = scalar_select %p823, %s51, 1
          %s825 = scalar_lea.vmem %s13, %s824
        $region96: #{protbert_forward.1} parent=47 // pred_fallthru
          _
        // Predicated region
        $region97: #{protbert_forward.1} parent=47 // pred_check
          %p826 = pneg %p429
        $region98: #{protbert_forward.1} parent=47 // pred_check_branch
          %828 = sbr.rel (%p826) target = $region100
        $region99: #{protbert_forward.1} parent=47 // pred_region
          %p829 = scmp.lt.s32.totalorder %s51, 1
          %s830 = scalar_select %p829, %s51, 1
          %s831 = scalar_lea.vmem %s14, %s830
        $region100: #{protbert_forward.1} parent=47 // pred_fallthru
          _
        // Predicated region
        $region101: #{protbert_forward.1} parent=47 // pred_check
          %p832 = pneg %p455
        $region102: #{protbert_forward.1} parent=47 // pred_check_branch
          %834 = sbr.rel (%p832) target = $region104
        $region103: #{protbert_forward.1} parent=47 // pred_region
          %p835 = scmp.lt.s32.totalorder %s51, 1
          %s836 = scalar_select %p835, %s51, 1
          %s837 = scalar_lea.vmem %s15, %s836
        $region104: #{protbert_forward.1} parent=47 // pred_fallthru
          _
      $region48: #{protbert_forward.1} parent=5 // pred_fallthru
        _
      %p838 = scmp.le.s32.totalorder 1, %s43
      %p839 = scmp.lt.s32.totalorder %s43, 5
      %p840 = pnand %p838, %p839
      %p841 = pneg %p840
      // Predicated region
      $region105: #{protbert_forward.1} parent=5 // pred_check
        _
      $region106: #{protbert_forward.1} parent=5 // pred_check_branch
        %843 = sbr.rel (%p840) target = $region108
      $region107: #{protbert_forward.1} parent=5 // pred_region
        %s844 = ssub.s32 %s43, 1
        %s845 = sand.u32 %s162, 1
        %s846 = scalar_lea.sflag [#allocation4], %s845
        %s847 = sand.u32 %s162, 1
        %s848 = smul.addr %s847, 192
        %s849 = scalar_lea.vmem [#allocation3], %s848
        // Predicated region
        $region109: #{protbert_forward.1} parent=107 // pred_check
          %p850 = pneg %p175
        $region110: #{protbert_forward.1} parent=107 // pred_check_branch
          %852 = sbr.rel (%p850) target = $region112
        $region111: #{protbert_forward.1} parent=107 // pred_region
          %854 = dma.done %s846, 3072
        $region112: #{protbert_forward.1} parent=107 // pred_fallthru
          _
        %s855 = sand.u32 %s48, 1
        %s856 = scalar_lea.sflag [#allocation7], %s855
        %s857 = sand.u32 %s370, 1
        %s858 = smul.addr %s857, 128
        %s859 = scalar_lea.vmem [#allocation6], %s858
        // Predicated region
        $region113: #{protbert_forward.1} parent=107 // pred_check
          %p860 = pneg %p383
        $region114: #{protbert_forward.1} parent=107 // pred_check_branch
          %862 = sbr.rel (%p860) target = $region116
        $region115: #{protbert_forward.1} parent=107 // pred_region
          %864 = dma.done %s856, 2048
        $region116: #{protbert_forward.1} parent=107 // pred_fallthru
          _
        // Predicated region
        $region117: #{protbert_forward.1} parent=107 // pred_check
          %p865 = pneg %p482
        $region118: #{protbert_forward.1} parent=107 // pred_check_branch
          %867 = sbr.rel (%p865) target = $region120
        $region119: #{protbert_forward.1} parent=107 // pred_region
          %869 = dma.done [#allocation7], 1024
        $region120: #{protbert_forward.1} parent=107 // pred_fallthru
          _
        // Predicated region
        $region121: #{protbert_forward.1} parent=107 // pred_check
          %p870 = pneg %p524
        $region122: #{protbert_forward.1} parent=107 // pred_check_branch
          %872 = sbr.rel (%p870) target = $region124
        $region123: #{protbert_forward.1} parent=107 // pred_region
          %874 = dma.done [#allocation10], 1024
        $region124: #{protbert_forward.1} parent=107 // pred_fallthru
          _
        // Predicated region
        $region125: #{protbert_forward.1} parent=107 // pred_check
          %p875 = pneg %p566
        $region126: #{protbert_forward.1} parent=107 // pred_check_branch
          %877 = sbr.rel (%p875) target = $region128
        $region127: #{protbert_forward.1} parent=107 // pred_region
          %879 = dma.done [#allocation10], 1024
        $region128: #{protbert_forward.1} parent=107 // pred_fallthru
          _
        %p880 = scmp.lt.s32.totalorder %s52, 1
        %s881 = scalar_select %p880, %s52, 1
        %s882 = smul.addr %s881, 8
        %s883 = scalar_lea.vmem %s0, %s882
        %p884 = pneg %p81
        %p885 = pneg %p78
        %p886 = scmp.lt.s32.totalorder %s52, 1
        %s887 = scalar_select %p886, %s52, 1
        %s888 = scalar_lea.vmem %s1, %s887
        %p889 = pneg %p107
        %p890 = pneg %p104
        %p891 = pneg %p128
        %p892 = pneg %p125
        %p893 = pneg %p149
        %p894 = pneg %p146
        %s895 = sand.u32 %s162, 1
        %s896 = scalar_lea.sflag [#allocation4], %s895
        %s897 = sand.u32 %s162, 1
        %s898 = smul.addr %s897, 192
        %s899 = scalar_lea.vmem [#allocation3], %s898
        %p900 = pneg %p175
        %p901 = pneg %p172
        %p902 = scmp.lt.s32.totalorder %s53, 1
        %s903 = scalar_select %p902, %s53, 1
        %s904 = smul.addr %s903, 3
        %s905 = scalar_lea.vmem %s5, %s904
        %p906 = pneg %p201
        %p907 = pneg %p198
        %p908 = scmp.lt.s32.totalorder %s53, 1
        %s909 = scalar_select %p908, %s53, 1
        %s910 = smul.addr %s909, 16
        %s911 = smul.addr %s910, 4
        %s912 = scalar_lea.vmem %s6, %s911
        %p913 = pneg %p227
        %p914 = pneg %p224
        %p915 = scmp.lt.s32.totalorder %s53, 1
        %s916 = scalar_select %p915, %s53, 1
        %s917 = scalar_lea.vmem %s7, %s916
        %p918 = pneg %p253
        %p919 = pneg %p250
        %p920 = scmp.lt.s32.totalorder %s53, 1
        %s921 = scalar_select %p920, %s53, 1
        %s922 = scalar_lea.vmem %s8, %s921
        %p923 = pneg %p279
        %p924 = pneg %p276
        %p925 = scmp.lt.s32.totalorder %s53, 1
        %s926 = scalar_select %p925, %s53, 1
        %s927 = scalar_lea.vmem %s9, %s926
        %p928 = pneg %p305
        %p929 = pneg %p302
        %p930 = scmp.lt.s32.totalorder %s53, 1
        %s931 = scalar_select %p930, %s53, 1
        %s932 = smul.addr %s931, 32
        %s933 = smul.addr %s932, 4
        %s934 = scalar_lea.vmem %s10, %s933
        %p935 = pneg %p331
        %p936 = pneg %p328
        %p937 = scmp.lt.s32.totalorder %s53, 1
        %s938 = scalar_select %p937, %s53, 1
        %s939 = smul.addr %s938, 2
        %s940 = scalar_lea.vmem %s11, %s939
        %p941 = pneg %p357
        %p942 = pneg %p354
        %s943 = sand.u32 %s48, 1
        %s944 = scalar_lea.sflag [#allocation7], %s943
        %s945 = sand.u32 %s370, 1
        %s946 = smul.addr %s945, 128
        %s947 = scalar_lea.vmem [#allocation6], %s946
        %p948 = pneg %p383
        %p949 = pneg %p380
        %p950 = scmp.lt.s32.totalorder %s53, 1
        %s951 = scalar_select %p950, %s53, 1
        %s952 = scalar_lea.vmem %s13, %s951
        %p953 = pneg %p409
        %p954 = pneg %p406
        %p955 = scmp.lt.s32.totalorder %s53, 1
        %s956 = scalar_select %p955, %s53, 1
        %s957 = scalar_lea.vmem %s14, %s956
        %p958 = pneg %p435
        %p959 = pneg %p432
        %p960 = scmp.lt.s32.totalorder %s53, 1
        %s961 = scalar_select %p960, %s53, 1
        %s962 = scalar_lea.vmem %s15, %s961
        %p963 = pneg %p461
        %p964 = pneg %p458
        %p965 = pneg %p482
        %p966 = pneg %p479
        %p967 = pneg %p503
        %p968 = pneg %p500
        %p969 = pneg %p524
        %p970 = pneg %p521
        %p971 = pneg %p545
        %p972 = pneg %p542
        %p973 = pneg %p566
        %p974 = pneg %p563
        %p975 = pneg %p587
        %p976 = pneg %p584
        %p977 = pneg %p613
        %p978 = pneg %p610
        %s979 = sand.u32 %s600, 1
        %s980 = scalar_lea.sflag [#allocation5], %s979
        %s981 = sand.u32 %s600, 1
        %s982 = scalar_lea.vmem [#allocation12], %s981
        %p983 = pneg %p639
        %p984 = pneg %p636
        %s985 = sand.u32 %s626, 1
        %s986 = scalar_lea.sflag [#allocation14], %s985
        %s987 = sand.u32 %s626, 1
        %s988 = scalar_lea.vmem [#allocation13], %s987
        %p989 = scmp.lt.s32.totalorder %s52, 1
        %s990 = scalar_select %p989, %s52, 1
        %s991 = smul.addr %s990, 8
        %s992 = scalar_lea.vmem %s0, %s991
        %p993 = scmp.lt.s32.totalorder %s52, 1
        %s994 = scalar_select %p993, %s52, 1
        %s995 = scalar_lea.vmem %s1, %s994
        %p996 = scmp.lt.s32.totalorder %s53, 1
        %s997 = scalar_select %p996, %s53, 1
        %s998 = smul.addr %s997, 3
        %s999 = scalar_lea.vmem %s5, %s998
        %p1000 = scmp.lt.s32.totalorder %s53, 1
        %s1001 = scalar_select %p1000, %s53, 1
        %s1002 = smul.addr %s1001, 16
        %s1003 = smul.addr %s1002, 4
        %s1004 = scalar_lea.vmem %s6, %s1003
        %p1005 = scmp.lt.s32.totalorder %s53, 1
        %s1006 = scalar_select %p1005, %s53, 1
        %s1007 = scalar_lea.vmem %s7, %s1006
        %p1008 = scmp.lt.s32.totalorder %s53, 1
        %s1009 = scalar_select %p1008, %s53, 1
        %s1010 = scalar_lea.vmem %s8, %s1009
        %p1011 = scmp.lt.s32.totalorder %s53, 1
        %s1012 = scalar_select %p1011, %s53, 1
        %s1013 = scalar_lea.vmem %s9, %s1012
        %p1014 = scmp.lt.s32.totalorder %s53, 1
        %s1015 = scalar_select %p1014, %s53, 1
        %s1016 = smul.addr %s1015, 32
        %s1017 = smul.addr %s1016, 4
        %s1018 = scalar_lea.vmem %s10, %s1017
        %p1019 = scmp.lt.s32.totalorder %s53, 1
        %s1020 = scalar_select %p1019, %s53, 1
        %s1021 = smul.addr %s1020, 2
        %s1022 = scalar_lea.vmem %s11, %s1021
        %p1023 = scmp.lt.s32.totalorder %s53, 1
        %s1024 = scalar_select %p1023, %s53, 1
        %s1025 = scalar_lea.vmem %s13, %s1024
        %p1026 = scmp.lt.s32.totalorder %s53, 1
        %s1027 = scalar_select %p1026, %s53, 1
        %s1028 = scalar_lea.vmem %s14, %s1027
        %p1029 = scmp.lt.s32.totalorder %s53, 1
        %s1030 = scalar_select %p1029, %s53, 1
        %s1031 = scalar_lea.vmem %s15, %s1030
        %p1033 = scmp.eq.s32.totalorder %s53, 0
        // Predicated region
        $region129: #{protbert_forward.1} parent=107 // pred_check
          %p1034 = pneg %p1033
        $region130: #{protbert_forward.1} parent=107 // pred_check_branch
          %1036 = sbr.rel (%p1034) target = $region132
        $region131: #{protbert_forward.1} parent=107 // pred_region
          %v1037 = vld [vmem:[%s992] sm:$0xff]
          %v1038 = vld [vmem:[%s2] sm:$0x1]
          %v1039 = vld [vmem:[%s3] sm:$0x1]
          %1040 = vadd.xlane.f32.xlu0 %v1037
          %v1041 = vpop.xlane.xlu0 %1040
          %v1042 = vrcp.pop 128.0
          %v1043 = vmul.f32 128.0, %v1042
          %v1044 = vsub.f32 1.0, %v1043
          %v1045 = vmul.f32 %v1042, %v1044
          %v1046 = vadd.f32 %v1042, %v1045
          %vm1047 = vweird.f32 %v1042
          %v1048 = vsel %vm1047, %v1042, %v1046
          %v1049 = vmul.f32 %v1041, %v1048
          %v1050 = vsub.f32 %v1037, %v1049
          %v1051 = vmul.f32 %v1050, %v1050
          %1052 = vadd.xlane.f32.xlu0 %v1051
          %v1053 = vpop.xlane.xlu0 %1052
          %v1054 = vmul.f32 %v1053, %v1048
          %v1055 = vadd.f32 %v1054, 1e-12
          %v1056 = vrsqrt.pop %v1055
          %v1057 = vmul.f32 %v1056, %v1055
          %v1058 = vmul.f32 %v1057, %v1056
          %v1059 = vmul.f32 0.5, %v1058
          %v1060 = vsub.f32 1.5, %v1059
          %v1061 = vmul.f32 %v1056, %v1060
          %vm1062 = vweird.f32 %v1055
          %vm1063 = vweird.f32 %v1056
          %vm1064 = vmor %vm1062, %vm1063
          %v1065 = vsel %vm1064, %v1056, %v1061
          %v1066 = vmul.f32 %v1050, %v1065
          %v1068 = vperm.slane %v1038, 0
          %v1070 = vmul.f32 %v1066, %v1068
          %v1072 = vperm.slane %v1039, 0
          %v1074 = vadd.f32 %v1070, %v1072
          %1075 = vst [vmem:[#allocation2] sm:$0xff] %v1074
        $region132: #{protbert_forward.1} parent=107 // pred_fallthru
          _
        %v1076 = vld [vmem:[#allocation2] sm:$0xff]
        %v1077 = vld [vmem:[%s995] sm:$0x1]
        %v1078 = vpack.c.bf16 %v1076, %v1076
        %v1079 = vld [vmem:[%s849] sm:$0xff]
        %v1080 = vld [vmem:[%s849 + $0x8] sm:$0xf]
        %v1081 = vld [vmem:[%s849 + $0xc] sm:$0xff]
        %v1082 = vld [vmem:[%s849 + $0x14] sm:$0xf]
        %v1083 = vld [vmem:[%s849 + $0x18] sm:$0xff]
        %v1084 = vld [vmem:[%s849 + $0x20] sm:$0xf]
        %v1085 = vld [vmem:[%s849 + $0x24] sm:$0xff]
        %v1086 = vld [vmem:[%s849 + $0x2c] sm:$0xf]
        %v1087 = vld [vmem:[%s849 + $0x30] sm:$0xff]
        %v1088 = vld [vmem:[%s849 + $0x38] sm:$0xf]
        %v1089 = vld [vmem:[%s849 + $0x3c] sm:$0xff]
        %v1090 = vld [vmem:[%s849 + $0x44] sm:$0xf]
        %v1091 = vld [vmem:[%s849 + $0x48] sm:$0xff]
        %v1092 = vld [vmem:[%s849 + $0x50] sm:$0xf]
        %v1093 = vld [vmem:[%s849 + $0x54] sm:$0xff]
        %v1094 = vld [vmem:[%s849 + $0x5c] sm:$0xf]
        %v1095 = vld [vmem:[%s849 + $0x60] sm:$0xff]
        %v1096 = vld [vmem:[%s849 + $0x68] sm:$0xf]
        %v1097 = vld [vmem:[%s849 + $0x6c] sm:$0xff]
        %v1098 = vld [vmem:[%s849 + $0x74] sm:$0xf]
        %v1099 = vld [vmem:[%s849 + $0x78] sm:$0xff]
        %v1100 = vld [vmem:[%s849 + $0x80] sm:$0xf]
        %v1101 = vld [vmem:[%s849 + $0x84] sm:$0xff]
        %v1102 = vld [vmem:[%s849 + $0x8c] sm:$0xf]
        %v1103 = vld [vmem:[%s849 + $0x90] sm:$0xff]
        %v1104 = vld [vmem:[%s849 + $0x98] sm:$0xf]
        %v1105 = vld [vmem:[%s849 + $0x9c] sm:$0xff]
        %v1106 = vld [vmem:[%s849 + $0xa4] sm:$0xf]
        %v1107 = vld [vmem:[%s849 + $0xa8] sm:$0xff]
        %v1108 = vld [vmem:[%s849 + $0xb0] sm:$0xf]
        %v1109 = vld [vmem:[%s849 + $0xb4] sm:$0xff]
        %v1110 = vld [vmem:[%s849 + $0xbc] sm:$0xf]
        %v1111 = vld [vmem:[%s999] sm:$0x7]
        %v1113 = vperm.slane %v1111, 0
        %v1114 = vperm.slane %v1111, 1
        %v1115 = vperm.slane %v1111, 2
        %v1151 = vunpack.c.l.b16 %v1079
        %v1152 = vunpack.c.h.b16 %v1079
        %v1153 = vunpack.c.l.b16 %v1080
        %v1154 = vunpack.c.l.b16 %v1081
        %v1155 = vunpack.c.h.b16 %v1081
        %v1156 = vunpack.c.l.b16 %v1082
        %v1157 = vunpack.c.l.b16 %v1083
        %v1158 = vunpack.c.h.b16 %v1083
        %v1159 = vunpack.c.l.b16 %v1084
        %v1160 = vunpack.c.l.b16 %v1085
        %v1161 = vunpack.c.h.b16 %v1085
        %v1162 = vunpack.c.l.b16 %v1086
        %v1163 = vunpack.c.l.b16 %v1087
        %v1164 = vunpack.c.h.b16 %v1087
        %v1165 = vunpack.c.l.b16 %v1088
        %v1166 = vunpack.c.l.b16 %v1089
        %v1167 = vunpack.c.h.b16 %v1089
        %v1168 = vunpack.c.l.b16 %v1090
        %v1169 = vunpack.c.l.b16 %v1091
        %v1170 = vunpack.c.h.b16 %v1091
        %v1171 = vunpack.c.l.b16 %v1092
        %v1172 = vunpack.c.l.b16 %v1093
        %v1173 = vunpack.c.h.b16 %v1093
        %v1174 = vunpack.c.l.b16 %v1094
        %v1175 = vunpack.c.l.b16 %v1095
        %v1176 = vunpack.c.h.b16 %v1095
        %v1177 = vunpack.c.l.b16 %v1096
        %v1178 = vunpack.c.l.b16 %v1097
        %v1179 = vunpack.c.h.b16 %v1097
        %v1180 = vunpack.c.l.b16 %v1098
        %v1181 = vunpack.c.l.b16 %v1099
        %v1182 = vunpack.c.h.b16 %v1099
        %v1183 = vunpack.c.l.b16 %v1100
        %v1184 = vunpack.c.l.b16 %v1101
        %v1185 = vunpack.c.h.b16 %v1101
        %v1186 = vunpack.c.l.b16 %v1102
        %v1187 = vunpack.c.l.b16 %v1103
        %v1188 = vunpack.c.h.b16 %v1103
        %v1189 = vunpack.c.l.b16 %v1104
        %v1190 = vunpack.c.l.b16 %v1105
        %v1191 = vunpack.c.h.b16 %v1105
        %v1192 = vunpack.c.l.b16 %v1106
        %v1193 = vunpack.c.l.b16 %v1107
        %v1194 = vunpack.c.h.b16 %v1107
        %v1195 = vunpack.c.l.b16 %v1108
        %v1196 = vunpack.c.l.b16 %v1109
        %v1197 = vunpack.c.h.b16 %v1109
        %v1198 = vunpack.c.l.b16 %v1110
        %v1199 = vpack.c.b16 %v1154, %v1151
        %v1200 = vpack.c.b16 %v1155, %v1152
        %v1201 = vpack.c.b16 %v1156, %v1153
        %v1202 = vpack.c.b16 %v1160, %v1157
        %v1203 = vpack.c.b16 %v1161, %v1158
        %v1204 = vpack.c.b16 %v1162, %v1159
        %v1205 = vpack.c.b16 %v1166, %v1163
        %v1206 = vpack.c.b16 %v1167, %v1164
        %v1207 = vpack.c.b16 %v1168, %v1165
        %v1208 = vpack.c.b16 %v1172, %v1169
        %v1209 = vpack.c.b16 %v1173, %v1170
        %v1210 = vpack.c.b16 %v1174, %v1171
        %v1211 = vpack.c.b16 %v1178, %v1175
        %v1212 = vpack.c.b16 %v1179, %v1176
        %v1213 = vpack.c.b16 %v1180, %v1177
        %v1214 = vpack.c.b16 %v1184, %v1181
        %v1215 = vpack.c.b16 %v1185, %v1182
        %v1216 = vpack.c.b16 %v1186, %v1183
        %v1217 = vpack.c.b16 %v1190, %v1187
        %v1218 = vpack.c.b16 %v1191, %v1188
        %v1219 = vpack.c.b16 %v1192, %v1189
        %v1220 = vpack.c.b16 %v1196, %v1193
        %v1221 = vpack.c.b16 %v1197, %v1194
        %v1222 = vpack.c.b16 %v1198, %v1195
        %1247 = vmatpush.bf16.msra.mxu0 %v1220
        %1248 = vmatpush.bf16.msra.mxu0 %v1217
        %1249 = vmatpush.bf16.msra.mxu0 %v1214
        %1250 = vmatpush.bf16.msra.mxu0 %v1211
        %1251 = vmatpush.bf16.msra.mxu0 %v1208
        %1252 = vmatpush.bf16.msra.mxu0 %v1205
        %1253 = vmatpush.bf16.msra.mxu0 %v1202
        %1254 = vmatpush.bf16.msra.mxu0 %v1199
        %1255 = vmatmul.bf16.gmra.mxu0 %v1078
        %v1256 = vpop.f32.mrf.mxu0
        %v1257 = vadd.f32 %v1113, %v1256
        %v1258 = vpop.f32.mrf.mxu0
        %1259 = vdwg.mxu0
        %1260 = vmatpush.bf16.msra.mxu0 %v1221
        %1261 = vmatpush.bf16.msra.mxu0 %v1218
        %1262 = vmatpush.bf16.msra.mxu0 %v1215
        %1263 = vmatpush.bf16.msra.mxu0 %v1212
        %1264 = vmatpush.bf16.msra.mxu0 %v1209
        %1265 = vmatpush.bf16.msra.mxu0 %v1206
        %1266 = vmatpush.bf16.msra.mxu0 %v1203
        %1267 = vmatpush.bf16.msra.mxu0 %v1200
        %1268 = vmatmul.bf16.gmra.mxu0 %v1078
        %v1269 = vpop.f32.mrf.mxu0
        %v1270 = vadd.f32 %v1114, %v1269
        %v1271 = vpop.f32.mrf.mxu0
        %1272 = vdwg.mxu0
        %1273 = vmatpush.bf16.msra.mxu0 %v1222
        %1274 = vmatpush.bf16.msra.mxu0 %v1219
        %1275 = vmatpush.bf16.msra.mxu0 %v1216
        %1276 = vmatpush.bf16.msra.mxu0 %v1213
        %1277 = vmatpush.bf16.msra.mxu0 %v1210
        %1278 = vmatpush.bf16.msra.mxu0 %v1207
        %1279 = vmatpush.bf16.msra.mxu0 %v1204
        %1280 = vmatpush.bf16.msra.mxu0 %v1201
        %1281 = vmatmul.bf16.gmra.mxu0 %v1078
        %v1282 = vpop.f32.mrf.mxu0
        %v1283 = vadd.f32 %v1115, %v1282
        %v1284 = vpop.f32.mrf.mxu0
        %1285 = vdwg.mxu0
        %v1286 = vpack.c.bf16 %v1257, %v1257
        %v1287 = vpack.c.bf16 %v1270, %v1270
        %v1288 = vpack.c.bf16 %v1283, %v1283
        %v1289 = vld [vmem:[%s1004] sm:$0xf]
        %v1290 = vld [vmem:[%s1004 + $0x4] sm:$0xf]
        %v1291 = vld [vmem:[%s1004 + $0x8] sm:$0xf]
        %v1292 = vld [vmem:[%s1004 + $0xc] sm:$0xf]
        %v1293 = vld [vmem:[%s1004 + $0x10] sm:$0xf]
        %v1294 = vld [vmem:[%s1004 + $0x14] sm:$0xf]
        %v1295 = vld [vmem:[%s1004 + $0x18] sm:$0xf]
        %v1296 = vld [vmem:[%s1004 + $0x1c] sm:$0xf]
        %v1297 = vld [vmem:[%s1004 + $0x20] sm:$0xf]
        %v1298 = vld [vmem:[%s1004 + $0x24] sm:$0xf]
        %v1299 = vld [vmem:[%s1004 + $0x28] sm:$0xf]
        %v1300 = vld [vmem:[%s1004 + $0x2c] sm:$0xf]
        %v1301 = vld [vmem:[%s1004 + $0x30] sm:$0xf]
        %v1302 = vld [vmem:[%s1004 + $0x34] sm:$0xf]
        %v1303 = vld [vmem:[%s1004 + $0x38] sm:$0xf]
        %v1304 = vld [vmem:[%s1004 + $0x3c] sm:$0xf]
        %vm1305 = vcmask 261120
        %v1307 = vsel %vm1305, %v1286, 0
        %v1310 = vsel %vm1305, %v1287, 0
        %1312 = vmatpush.bf16.xpose.msra.mxu0 0
        %1313 = vmatpush.bf16.xpose.msra.mxu0 0
        %1314 = vmatpush.bf16.xpose.msra.mxu0 0
        %1315 = vmatpush.bf16.xpose.msra.mxu0 0
        %1316 = vmatpush.bf16.xpose.msra.mxu0 0
        %1317 = vmatpush.bf16.xpose.msra.mxu0 0
        %1318 = vmatpush.bf16.xpose.msra.mxu0 0
        %1319 = vmatpush.bf16.xpose.msra.mxu0 %v1310
        %1320 = vmatmul.bf16.gmra.mxu0 %v1307
        %v1321 = vpop.f32.mrf.mxu0
        %v1322 = vadd.f32 0.0, %v1321
        %v1323 = vpop.f32.mrf.mxu0
        %1324 = vdwg.mxu0
        %v1325 = vmul.f32 %v1322, 0.17677669
        %v1327 = vperm.slane %v1077, 0
        %v1329 = vadd.f32 %v1325, %v1327
        %vm1330 = vcmask 64512
        %v1331 = vsel %vm1330, %v1329, -inf
        %1332 = vmax.xlane.f32.xlu0 %v1331
        %v1333 = vpop.xlane.xlu0 %1332
        %v1334 = vsub.f32 %v1329, %v1333
        %v1335 = vmul.f32 %v1334, 1.442695
        %v1336 = vpow.pop %v1335
        %v1337 = vsel %vm1330, %v1336, 0.0
        %1338 = vadd.xlane.f32.xlu0 %v1337
        %v1339 = vpop.xlane.xlu0 %1338
        %v1340 = vrcp.pop %v1339
        %v1341 = vmul.f32 %v1339, %v1340
        %v1342 = vsub.f32 1.0, %v1341
        %v1343 = vmul.f32 %v1340, %v1342
        %v1344 = vadd.f32 %v1340, %v1343
        %vm1345 = vweird.f32 %v1339
        %vm1346 = vweird.f32 %v1340
        %vm1347 = vmor %vm1345, %vm1346
        %v1348 = vsel %vm1347, %v1340, %v1344
        %v1349 = vand.u32 2147483647, %v1339
        %vm1350 = vcmp.eq.f32.partialorder %v1349, 8.507059e+37
        %v1351 = vand.u32 %v1339, 2147483648
        %v1352 = vor.u32 1.1754944e-38, %v1351
        %v1353 = vsel %vm1350, %v1352, %v1348
        %v1354 = vmul.f32 %v1336, %v1353
        %v1355 = vpack.c.bf16 %v1354, %v1354
        %v1357 = vsel %vm1330, %v1355, 0
        %vm1359 = vcmask 1043456
        %v1361 = vsel %vm1359, %v1288, 0
        %1363 = vmatpush.bf16.msra.mxu0 0
        %1364 = vmatpush.bf16.msra.mxu0 0
        %1365 = vmatpush.bf16.msra.mxu0 0
        %1366 = vmatpush.bf16.msra.mxu0 0
        %1367 = vmatpush.bf16.msra.mxu0 0
        %1368 = vmatpush.bf16.msra.mxu0 0
        %1369 = vmatpush.bf16.msra.mxu0 0
        %1370 = vmatpush.bf16.msra.mxu0 %v1361
        %1371 = vmatmul.bf16.gmra.mxu0 %v1357
        %v1372 = vpop.f32.mrf.mxu0
        %v1373 = vadd.f32 0.0, %v1372
        %v1374 = vpop.f32.mrf.mxu0
        %1375 = vdwg.mxu0
        %v1376 = vpack.c.bf16 %v1373, %v1373
        %v1378 = vunpack.c.l.b16 %v1286
        %v1379 = vpack.c.b16 %v1378, %v1378
        %1380 = vrot.lane.b32.xlu0 %v1379, 96
        %v1381 = vpop.permute.xlu0 %1380
        %v1383 = vunpack.c.l.b16 %v1287
        %v1384 = vpack.c.b16 %v1383, %v1383
        %1385 = vrot.lane.b32.xlu0 %v1384, 96
        %v1386 = vpop.permute.xlu0 %1385
        %v1388 = vsel %vm1305, %v1381, 0
        %v1391 = vsel %vm1305, %v1386, 0
        %1393 = vmatpush.bf16.xpose.msra.mxu0 0
        %1394 = vmatpush.bf16.xpose.msra.mxu0 0
        %1395 = vmatpush.bf16.xpose.msra.mxu0 0
        %1396 = vmatpush.bf16.xpose.msra.mxu0 0
        %1397 = vmatpush.bf16.xpose.msra.mxu0 0
        %1398 = vmatpush.bf16.xpose.msra.mxu0 0
        %1399 = vmatpush.bf16.xpose.msra.mxu0 0
        %1400 = vmatpush.bf16.xpose.msra.mxu0 %v1391
        %1401 = vmatmul.bf16.gmra.mxu0 %v1388
        %v1402 = vpop.f32.mrf.mxu0
        %v1403 = vadd.f32 0.0, %v1402
        %v1404 = vpop.f32.mrf.mxu0
        %1405 = vdwg.mxu0
        %v1406 = vmul.f32 %v1403, 0.17677669
        %v1407 = vadd.f32 %v1406, %v1327
        %v1408 = vsel %vm1330, %v1407, -inf
        %1409 = vmax.xlane.f32.xlu0 %v1408
        %v1410 = vpop.xlane.xlu0 %1409
        %v1411 = vsub.f32 %v1407, %v1410
        %v1412 = vmul.f32 %v1411, 1.442695
        %v1413 = vpow.pop %v1412
        %v1414 = vsel %vm1330, %v1413, 0.0
        %1415 = vadd.xlane.f32.xlu0 %v1414
        %v1416 = vpop.xlane.xlu0 %1415
        %v1417 = vrcp.pop %v1416
        %v1418 = vmul.f32 %v1416, %v1417
        %v1419 = vsub.f32 1.0, %v1418
        %v1420 = vmul.f32 %v1417, %v1419
        %v1421 = vadd.f32 %v1417, %v1420
        %vm1422 = vweird.f32 %v1416
        %vm1423 = vweird.f32 %v1417
        %vm1424 = vmor %vm1422, %vm1423
        %v1425 = vsel %vm1424, %v1417, %v1421
        %v1426 = vand.u32 2147483647, %v1416
        %vm1427 = vcmp.eq.f32.partialorder %v1426, 8.507059e+37
        %v1428 = vand.u32 %v1416, 2147483648
        %v1429 = vor.u32 1.1754944e-38, %v1428
        %v1430 = vsel %vm1427, %v1429, %v1425
        %v1431 = vmul.f32 %v1413, %v1430
        %v1432 = vpack.c.bf16 %v1431, %v1431
        %v1434 = vunpack.c.l.b16 %v1288
        %v1435 = vpack.c.b16 %v1434, %v1434
        %1436 = vrot.lane.b32.xlu0 %v1435, 96
        %v1437 = vpop.permute.xlu0 %1436
        %v1439 = vsel %vm1330, %v1432, 0
        %v1442 = vsel %vm1359, %v1437, 0
        %1444 = vmatpush.bf16.msra.mxu0 0
        %1445 = vmatpush.bf16.msra.mxu0 0
        %1446 = vmatpush.bf16.msra.mxu0 0
        %1447 = vmatpush.bf16.msra.mxu0 0
        %1448 = vmatpush.bf16.msra.mxu0 0
        %1449 = vmatpush.bf16.msra.mxu0 0
        %1450 = vmatpush.bf16.msra.mxu0 0
        %1451 = vmatpush.bf16.msra.mxu0 %v1442
        %1452 = vmatmul.bf16.gmra.mxu0 %v1439
        %v1453 = vpop.f32.mrf.mxu0
        %v1454 = vadd.f32 0.0, %v1453
        %v1455 = vpop.f32.mrf.mxu0
        %1456 = vdwg.mxu0
        %v1457 = vpack.c.bf16 %v1454, %v1454
        %v1462 = vunpack.c.l.b16 %v1293
        %v1463 = vunpack.c.l.b16 %v1294
        %v1464 = vunpack.c.l.b16 %v1295
        %v1465 = vunpack.c.l.b16 %v1296
        %v1466 = vpack.c.b16 %v1463, %v1462
        %v1467 = vpack.c.b16 %v1465, %v1464
        %v1471 = vsel %vm1305, %v1457, 0
        %1473 = vmatpush.bf16.msra.mxu0 0
        %1474 = vmatpush.bf16.msra.mxu0 0
        %1475 = vmatpush.bf16.msra.mxu0 0
        %1476 = vmatpush.bf16.msra.mxu0 0
        %1477 = vmatpush.bf16.msra.mxu0 0
        %1478 = vmatpush.bf16.msra.mxu0 0
        %1479 = vmatpush.bf16.msra.mxu0 %v1467
        %1480 = vmatpush.bf16.msra.mxu0 %v1466
        %1481 = vmatmul.bf16.gmra.mxu0 %v1471
        %v1482 = vpop.f32.mrf.mxu0
        %v1483 = vadd.f32 0.0, %v1482
        %v1484 = vpop.f32.mrf.mxu0
        %1485 = vdwg.mxu0
        %v1490 = vunpack.c.l.b16 %v1289
        %v1491 = vunpack.c.l.b16 %v1290
        %v1492 = vunpack.c.l.b16 %v1291
        %v1493 = vunpack.c.l.b16 %v1292
        %v1494 = vpack.c.b16 %v1491, %v1490
        %v1495 = vpack.c.b16 %v1493, %v1492
        %v1499 = vsel %vm1305, %v1376, 0
        %1501 = vmatpush.bf16.msra.mxu0 0
        %1502 = vmatpush.bf16.msra.mxu0 0
        %1503 = vmatpush.bf16.msra.mxu0 0
        %1504 = vmatpush.bf16.msra.mxu0 0
        %1505 = vmatpush.bf16.msra.mxu0 0
        %1506 = vmatpush.bf16.msra.mxu0 0
        %1507 = vmatpush.bf16.msra.mxu0 %v1495
        %1508 = vmatpush.bf16.msra.mxu0 %v1494
        %1509 = vmatmul.bf16.gmra.mxu0 %v1499
        %v1510 = vpop.f32.mrf.mxu0
        %v1511 = vadd.f32 %v1483, %v1510
        %v1512 = vpop.f32.mrf.mxu0
        %1513 = vdwg.mxu0
        %1514 = vrot.lane.b32.xlu0 %v1379, 64
        %v1515 = vpop.permute.xlu0 %1514
        %1516 = vrot.lane.b32.xlu0 %v1384, 64
        %v1517 = vpop.permute.xlu0 %1516
        %v1519 = vsel %vm1305, %v1515, 0
        %v1522 = vsel %vm1305, %v1517, 0
        %1524 = vmatpush.bf16.xpose.msra.mxu0 0
        %1525 = vmatpush.bf16.xpose.msra.mxu0 0
        %1526 = vmatpush.bf16.xpose.msra.mxu0 0
        %1527 = vmatpush.bf16.xpose.msra.mxu0 0
        %1528 = vmatpush.bf16.xpose.msra.mxu0 0
        %1529 = vmatpush.bf16.xpose.msra.mxu0 0
        %1530 = vmatpush.bf16.xpose.msra.mxu0 0
        %1531 = vmatpush.bf16.xpose.msra.mxu0 %v1522
        %1532 = vmatmul.bf16.gmra.mxu0 %v1519
        %v1533 = vpop.f32.mrf.mxu0
        %v1534 = vadd.f32 0.0, %v1533
        %v1535 = vpop.f32.mrf.mxu0
        %1536 = vdwg.mxu0
        %v1537 = vmul.f32 %v1534, 0.17677669
        %v1538 = vadd.f32 %v1537, %v1327
        %v1539 = vsel %vm1330, %v1538, -inf
        %1540 = vmax.xlane.f32.xlu0 %v1539
        %v1541 = vpop.xlane.xlu0 %1540
        %v1542 = vsub.f32 %v1538, %v1541
        %v1543 = vmul.f32 %v1542, 1.442695
        %v1544 = vpow.pop %v1543
        %v1545 = vsel %vm1330, %v1544, 0.0
        %1546 = vadd.xlane.f32.xlu0 %v1545
        %v1547 = vpop.xlane.xlu0 %1546
        %v1548 = vrcp.pop %v1547
        %v1549 = vmul.f32 %v1547, %v1548
        %v1550 = vsub.f32 1.0, %v1549
        %v1551 = vmul.f32 %v1548, %v1550
        %v1552 = vadd.f32 %v1548, %v1551
        %vm1553 = vweird.f32 %v1547
        %vm1554 = vweird.f32 %v1548
        %vm1555 = vmor %vm1553, %vm1554
        %v1556 = vsel %vm1555, %v1548, %v1552
        %v1557 = vand.u32 2147483647, %v1547
        %vm1558 = vcmp.eq.f32.partialorder %v1557, 8.507059e+37
        %v1559 = vand.u32 %v1547, 2147483648
        %v1560 = vor.u32 1.1754944e-38, %v1559
        %v1561 = vsel %vm1558, %v1560, %v1556
        %v1562 = vmul.f32 %v1544, %v1561
        %v1563 = vpack.c.bf16 %v1562, %v1562
        %1564 = vrot.lane.b32.xlu0 %v1435, 64
        %v1565 = vpop.permute.xlu0 %1564
        %v1567 = vsel %vm1330, %v1563, 0
        %v1570 = vsel %vm1359, %v1565, 0
        %1572 = vmatpush.bf16.msra.mxu0 0
        %1573 = vmatpush.bf16.msra.mxu0 0
        %1574 = vmatpush.bf16.msra.mxu0 0
        %1575 = vmatpush.bf16.msra.mxu0 0
        %1576 = vmatpush.bf16.msra.mxu0 0
        %1577 = vmatpush.bf16.msra.mxu0 0
        %1578 = vmatpush.bf16.msra.mxu0 0
        %1579 = vmatpush.bf16.msra.mxu0 %v1570
        %1580 = vmatmul.bf16.gmra.mxu0 %v1567
        %v1581 = vpop.f32.mrf.mxu0
        %v1582 = vadd.f32 0.0, %v1581
        %v1583 = vpop.f32.mrf.mxu0
        %1584 = vdwg.mxu0
        %v1585 = vpack.c.bf16 %v1582, %v1582
        %v1590 = vunpack.c.l.b16 %v1297
        %v1591 = vunpack.c.l.b16 %v1298
        %v1592 = vunpack.c.l.b16 %v1299
        %v1593 = vunpack.c.l.b16 %v1300
        %v1594 = vpack.c.b16 %v1591, %v1590
        %v1595 = vpack.c.b16 %v1593, %v1592
        %v1599 = vsel %vm1305, %v1585, 0
        %1601 = vmatpush.bf16.msra.mxu0 0
        %1602 = vmatpush.bf16.msra.mxu0 0
        %1603 = vmatpush.bf16.msra.mxu0 0
        %1604 = vmatpush.bf16.msra.mxu0 0
        %1605 = vmatpush.bf16.msra.mxu0 0
        %1606 = vmatpush.bf16.msra.mxu0 0
        %1607 = vmatpush.bf16.msra.mxu0 %v1595
        %1608 = vmatpush.bf16.msra.mxu0 %v1594
        %1609 = vmatmul.bf16.gmra.mxu0 %v1599
        %v1610 = vpop.f32.mrf.mxu0
        %v1611 = vadd.f32 0.0, %v1610
        %v1612 = vpop.f32.mrf.mxu0
        %1613 = vdwg.mxu0
        %v1614 = vadd.f32 %v1511, %v1611
        %1615 = vrot.lane.b32.xlu0 %v1379, 32
        %v1616 = vpop.permute.xlu0 %1615
        %1617 = vrot.lane.b32.xlu0 %v1384, 32
        %v1618 = vpop.permute.xlu0 %1617
        %v1620 = vsel %vm1305, %v1616, 0
        %v1623 = vsel %vm1305, %v1618, 0
        %1625 = vmatpush.bf16.xpose.msra.mxu0 0
        %1626 = vmatpush.bf16.xpose.msra.mxu0 0
        %1627 = vmatpush.bf16.xpose.msra.mxu0 0
        %1628 = vmatpush.bf16.xpose.msra.mxu0 0
        %1629 = vmatpush.bf16.xpose.msra.mxu0 0
        %1630 = vmatpush.bf16.xpose.msra.mxu0 0
        %1631 = vmatpush.bf16.xpose.msra.mxu0 0
        %1632 = vmatpush.bf16.xpose.msra.mxu0 %v1623
        %1633 = vmatmul.bf16.gmra.mxu0 %v1620
        %v1634 = vpop.f32.mrf.mxu0
        %v1635 = vadd.f32 0.0, %v1634
        %v1636 = vpop.f32.mrf.mxu0
        %1637 = vdwg.mxu0
        %v1638 = vmul.f32 %v1635, 0.17677669
        %v1639 = vadd.f32 %v1638, %v1327
        %v1640 = vsel %vm1330, %v1639, -inf
        %1641 = vmax.xlane.f32.xlu0 %v1640
        %v1642 = vpop.xlane.xlu0 %1641
        %v1643 = vsub.f32 %v1639, %v1642
        %v1644 = vmul.f32 %v1643, 1.442695
        %v1645 = vpow.pop %v1644
        %v1646 = vsel %vm1330, %v1645, 0.0
        %1647 = vadd.xlane.f32.xlu0 %v1646
        %v1648 = vpop.xlane.xlu0 %1647
        %v1649 = vrcp.pop %v1648
        %v1650 = vmul.f32 %v1648, %v1649
        %v1651 = vsub.f32 1.0, %v1650
        %v1652 = vmul.f32 %v1649, %v1651
        %v1653 = vadd.f32 %v1649, %v1652
        %vm1654 = vweird.f32 %v1648
        %vm1655 = vweird.f32 %v1649
        %vm1656 = vmor %vm1654, %vm1655
        %v1657 = vsel %vm1656, %v1649, %v1653
        %v1658 = vand.u32 2147483647, %v1648
        %vm1659 = vcmp.eq.f32.partialorder %v1658, 8.507059e+37
        %v1660 = vand.u32 %v1648, 2147483648
        %v1661 = vor.u32 1.1754944e-38, %v1660
        %v1662 = vsel %vm1659, %v1661, %v1657
        %v1663 = vmul.f32 %v1645, %v1662
        %v1664 = vpack.c.bf16 %v1663, %v1663
        %1665 = vrot.lane.b32.xlu0 %v1435, 32
        %v1666 = vpop.permute.xlu0 %1665
        %v1668 = vsel %vm1330, %v1664, 0
        %v1671 = vsel %vm1359, %v1666, 0
        %1673 = vmatpush.bf16.msra.mxu0 0
        %1674 = vmatpush.bf16.msra.mxu0 0
        %1675 = vmatpush.bf16.msra.mxu0 0
        %1676 = vmatpush.bf16.msra.mxu0 0
        %1677 = vmatpush.bf16.msra.mxu0 0
        %1678 = vmatpush.bf16.msra.mxu0 0
        %1679 = vmatpush.bf16.msra.mxu0 0
        %1680 = vmatpush.bf16.msra.mxu0 %v1671
        %1681 = vmatmul.bf16.gmra.mxu0 %v1668
        %v1682 = vpop.f32.mrf.mxu0
        %v1683 = vadd.f32 0.0, %v1682
        %v1684 = vpop.f32.mrf.mxu0
        %1685 = vdwg.mxu0
        %v1686 = vpack.c.bf16 %v1683, %v1683
        %v1691 = vunpack.c.l.b16 %v1301
        %v1692 = vunpack.c.l.b16 %v1302
        %v1693 = vunpack.c.l.b16 %v1303
        %v1694 = vunpack.c.l.b16 %v1304
        %v1695 = vpack.c.b16 %v1692, %v1691
        %v1696 = vpack.c.b16 %v1694, %v1693
        %v1700 = vsel %vm1305, %v1686, 0
        %1702 = vmatpush.bf16.msra.mxu0 0
        %1703 = vmatpush.bf16.msra.mxu0 0
        %1704 = vmatpush.bf16.msra.mxu0 0
        %1705 = vmatpush.bf16.msra.mxu0 0
        %1706 = vmatpush.bf16.msra.mxu0 0
        %1707 = vmatpush.bf16.msra.mxu0 0
        %1708 = vmatpush.bf16.msra.mxu0 %v1696
        %1709 = vmatpush.bf16.msra.mxu0 %v1695
        %1710 = vmatmul.bf16.gmra.mxu0 %v1700
        %v1711 = vpop.f32.mrf.mxu0
        %v1712 = vadd.f32 0.0, %v1711
        %v1713 = vpop.f32.mrf.mxu0
        %1714 = vdwg.mxu0
        %v1715 = vadd.f32 %v1614, %v1712
        %v1716 = vld [vmem:[%s1007] sm:$0x1]
        %v1718 = vperm.slane %v1716, 0
        %v1720 = vadd.f32 %v1715, %v1718
        %v1721 = vadd.f32 %v1720, %v1076
        %v1722 = vld [vmem:[%s1010] sm:$0x1]
        %v1723 = vld [vmem:[%s1013] sm:$0x1]
        %1724 = vadd.xlane.f32.xlu0 %v1721
        %v1725 = vpop.xlane.xlu0 %1724
        %v1726 = vrcp.pop 128.0
        %v1727 = vmul.f32 128.0, %v1726
        %v1728 = vsub.f32 1.0, %v1727
        %v1729 = vmul.f32 %v1726, %v1728
        %v1730 = vadd.f32 %v1726, %v1729
        %vm1731 = vweird.f32 %v1726
        %v1732 = vsel %vm1731, %v1726, %v1730
        %v1733 = vmul.f32 %v1725, %v1732
        %v1734 = vsub.f32 %v1721, %v1733
        %v1735 = vmul.f32 %v1734, %v1734
        %1736 = vadd.xlane.f32.xlu0 %v1735
        %v1737 = vpop.xlane.xlu0 %1736
        %v1738 = vmul.f32 %v1737, %v1732
        %v1739 = vadd.f32 %v1738, 1e-12
        %v1740 = vrsqrt.pop %v1739
        %v1741 = vmul.f32 %v1740, %v1739
        %v1742 = vmul.f32 %v1741, %v1740
        %v1743 = vmul.f32 0.5, %v1742
        %v1744 = vsub.f32 1.5, %v1743
        %v1745 = vmul.f32 %v1740, %v1744
        %vm1746 = vweird.f32 %v1739
        %vm1747 = vweird.f32 %v1740
        %vm1748 = vmor %vm1746, %vm1747
        %v1749 = vsel %vm1748, %v1740, %v1745
        %v1750 = vmul.f32 %v1734, %v1749
        %v1752 = vperm.slane %v1722, 0
        %v1754 = vmul.f32 %v1750, %v1752
        %v1756 = vperm.slane %v1723, 0
        %v1758 = vadd.f32 %v1754, %v1756
        %v1759 = vpack.c.bf16 %v1758, %v1758
        %v1760 = vld [vmem:[%s1018] sm:$0xff]
        %v1761 = vld [vmem:[%s1018 + $0x8] sm:$0xff]
        %v1762 = vld [vmem:[%s1018 + $0x10] sm:$0xff]
        %v1763 = vld [vmem:[%s1018 + $0x18] sm:$0xff]
        %v1764 = vld [vmem:[%s1018 + $0x20] sm:$0xff]
        %v1765 = vld [vmem:[%s1018 + $0x28] sm:$0xff]
        %v1766 = vld [vmem:[%s1018 + $0x30] sm:$0xff]
        %v1767 = vld [vmem:[%s1018 + $0x38] sm:$0xff]
        %v1768 = vld [vmem:[%s1018 + $0x40] sm:$0xff]
        %v1769 = vld [vmem:[%s1018 + $0x48] sm:$0xff]
        %v1770 = vld [vmem:[%s1018 + $0x50] sm:$0xff]
        %v1771 = vld [vmem:[%s1018 + $0x58] sm:$0xff]
        %v1772 = vld [vmem:[%s1018 + $0x60] sm:$0xff]
        %v1773 = vld [vmem:[%s1018 + $0x68] sm:$0xff]
        %v1774 = vld [vmem:[%s1018 + $0x70] sm:$0xff]
        %v1775 = vld [vmem:[%s1018 + $0x78] sm:$0xff]
        %v1776 = vld [vmem:[%s1022] sm:$0x3]
        %v1778 = vperm.slane %v1776, 0
        %v1779 = vperm.slane %v1776, 1
        %v1798 = vunpack.c.l.b16 %v1760
        %v1799 = vunpack.c.h.b16 %v1760
        %v1800 = vunpack.c.l.b16 %v1761
        %v1801 = vunpack.c.h.b16 %v1761
        %v1802 = vunpack.c.l.b16 %v1762
        %v1803 = vunpack.c.h.b16 %v1762
        %v1804 = vunpack.c.l.b16 %v1763
        %v1805 = vunpack.c.h.b16 %v1763
        %v1806 = vunpack.c.l.b16 %v1764
        %v1807 = vunpack.c.h.b16 %v1764
        %v1808 = vunpack.c.l.b16 %v1765
        %v1809 = vunpack.c.h.b16 %v1765
        %v1810 = vunpack.c.l.b16 %v1766
        %v1811 = vunpack.c.h.b16 %v1766
        %v1812 = vunpack.c.l.b16 %v1767
        %v1813 = vunpack.c.h.b16 %v1767
        %v1814 = vunpack.c.l.b16 %v1768
        %v1815 = vunpack.c.h.b16 %v1768
        %v1816 = vunpack.c.l.b16 %v1769
        %v1817 = vunpack.c.h.b16 %v1769
        %v1818 = vunpack.c.l.b16 %v1770
        %v1819 = vunpack.c.h.b16 %v1770
        %v1820 = vunpack.c.l.b16 %v1771
        %v1821 = vunpack.c.h.b16 %v1771
        %v1822 = vunpack.c.l.b16 %v1772
        %v1823 = vunpack.c.h.b16 %v1772
        %v1824 = vunpack.c.l.b16 %v1773
        %v1825 = vunpack.c.h.b16 %v1773
        %v1826 = vunpack.c.l.b16 %v1774
        %v1827 = vunpack.c.h.b16 %v1774
        %v1828 = vunpack.c.l.b16 %v1775
        %v1829 = vunpack.c.h.b16 %v1775
        %v1830 = vpack.c.b16 %v1800, %v1798
        %v1831 = vpack.c.b16 %v1801, %v1799
        %v1832 = vpack.c.b16 %v1804, %v1802
        %v1833 = vpack.c.b16 %v1805, %v1803
        %v1834 = vpack.c.b16 %v1808, %v1806
        %v1835 = vpack.c.b16 %v1809, %v1807
        %v1836 = vpack.c.b16 %v1812, %v1810
        %v1837 = vpack.c.b16 %v1813, %v1811
        %v1838 = vpack.c.b16 %v1816, %v1814
        %v1839 = vpack.c.b16 %v1817, %v1815
        %v1840 = vpack.c.b16 %v1820, %v1818
        %v1841 = vpack.c.b16 %v1821, %v1819
        %v1842 = vpack.c.b16 %v1824, %v1822
        %v1843 = vpack.c.b16 %v1825, %v1823
        %v1844 = vpack.c.b16 %v1828, %v1826
        %v1845 = vpack.c.b16 %v1829, %v1827
        %1862 = vmatpush.bf16.msra.mxu0 %v1844
        %1863 = vmatpush.bf16.msra.mxu0 %v1842
        %1864 = vmatpush.bf16.msra.mxu0 %v1840
        %1865 = vmatpush.bf16.msra.mxu0 %v1838
        %1866 = vmatpush.bf16.msra.mxu0 %v1836
        %1867 = vmatpush.bf16.msra.mxu0 %v1834
        %1868 = vmatpush.bf16.msra.mxu0 %v1832
        %1869 = vmatpush.bf16.msra.mxu0 %v1830
        %1870 = vmatmul.bf16.gmra.mxu0 %v1759
        %v1871 = vpop.f32.mrf.mxu0
        %v1872 = vadd.f32 %v1778, %v1871
        %v1873 = vpop.f32.mrf.mxu0
        %1874 = vdwg.mxu0
        %1875 = vmatpush.bf16.msra.mxu0 %v1845
        %1876 = vmatpush.bf16.msra.mxu0 %v1843
        %1877 = vmatpush.bf16.msra.mxu0 %v1841
        %1878 = vmatpush.bf16.msra.mxu0 %v1839
        %1879 = vmatpush.bf16.msra.mxu0 %v1837
        %1880 = vmatpush.bf16.msra.mxu0 %v1835
        %1881 = vmatpush.bf16.msra.mxu0 %v1833
        %1882 = vmatpush.bf16.msra.mxu0 %v1831
        %1883 = vmatmul.bf16.gmra.mxu0 %v1759
        %v1884 = vpop.f32.mrf.mxu0
        %v1885 = vadd.f32 %v1779, %v1884
        %v1886 = vpop.f32.mrf.mxu0
        %1887 = vdwg.mxu0
        %v1888 = vmul.f32 %v1872, 0.5
        %v1889 = vmul.f32 %v1885, 0.5
        %v1890 = vmul.f32 %v1872, 0.044715
        %v1891 = vmul.f32 %v1885, 0.044715
        %v1892 = vmul.f32 %v1890, %v1872
        %v1893 = vmul.f32 %v1891, %v1885
        %v1894 = vmul.f32 %v1892, %v1872
        %v1895 = vmul.f32 %v1893, %v1885
        %v1896 = vadd.f32 %v1872, %v1894
        %v1897 = vadd.f32 %v1885, %v1895
        %v1898 = vmul.f32 %v1896, 0.7978846
        %v1899 = vmul.f32 %v1897, 0.7978846
        %v1900 = vtanh.pop %v1898
        %v1901 = vtanh.pop %v1899
        %v1902 = vadd.f32 %v1900, 1.0
        %v1903 = vadd.f32 %v1901, 1.0
        %v1904 = vmul.f32 %v1888, %v1902
        %v1905 = vmul.f32 %v1889, %v1903
        %v1906 = vpack.c.bf16 %v1904, %v1904
        %v1907 = vpack.c.bf16 %v1905, %v1905
        %v1908 = vld [vmem:[%s859] sm:$0xf]
        %v1909 = vld [vmem:[%s859 + $0x4] sm:$0xf]
        %v1910 = vld [vmem:[%s859 + $0x8] sm:$0xf]
        %v1911 = vld [vmem:[%s859 + $0xc] sm:$0xf]
        %v1912 = vld [vmem:[%s859 + $0x10] sm:$0xf]
        %v1913 = vld [vmem:[%s859 + $0x14] sm:$0xf]
        %v1914 = vld [vmem:[%s859 + $0x18] sm:$0xf]
        %v1915 = vld [vmem:[%s859 + $0x1c] sm:$0xf]
        %v1916 = vld [vmem:[%s859 + $0x20] sm:$0xf]
        %v1917 = vld [vmem:[%s859 + $0x24] sm:$0xf]
        %v1918 = vld [vmem:[%s859 + $0x28] sm:$0xf]
        %v1919 = vld [vmem:[%s859 + $0x2c] sm:$0xf]
        %v1920 = vld [vmem:[%s859 + $0x30] sm:$0xf]
        %v1921 = vld [vmem:[%s859 + $0x34] sm:$0xf]
        %v1922 = vld [vmem:[%s859 + $0x38] sm:$0xf]
        %v1923 = vld [vmem:[%s859 + $0x3c] sm:$0xf]
        %v1924 = vld [vmem:[%s859 + $0x40] sm:$0xf]
        %v1925 = vld [vmem:[%s859 + $0x44] sm:$0xf]
        %v1926 = vld [vmem:[%s859 + $0x48] sm:$0xf]
        %v1927 = vld [vmem:[%s859 + $0x4c] sm:$0xf]
        %v1928 = vld [vmem:[%s859 + $0x50] sm:$0xf]
        %v1929 = vld [vmem:[%s859 + $0x54] sm:$0xf]
        %v1930 = vld [vmem:[%s859 + $0x58] sm:$0xf]
        %v1931 = vld [vmem:[%s859 + $0x5c] sm:$0xf]
        %v1932 = vld [vmem:[%s859 + $0x60] sm:$0xf]
        %v1933 = vld [vmem:[%s859 + $0x64] sm:$0xf]
        %v1934 = vld [vmem:[%s859 + $0x68] sm:$0xf]
        %v1935 = vld [vmem:[%s859 + $0x6c] sm:$0xf]
        %v1936 = vld [vmem:[%s859 + $0x70] sm:$0xf]
        %v1937 = vld [vmem:[%s859 + $0x74] sm:$0xf]
        %v1938 = vld [vmem:[%s859 + $0x78] sm:$0xf]
        %v1939 = vld [vmem:[%s859 + $0x7c] sm:$0xf]
        %v1940 = vld [vmem:[%s1025] sm:$0x1]
        %v1942 = vperm.slane %v1940, 0
        %v1976 = vunpack.c.l.b16 %v1908
        %v1977 = vunpack.c.l.b16 %v1909
        %v1978 = vunpack.c.l.b16 %v1910
        %v1979 = vunpack.c.l.b16 %v1911
        %v1980 = vunpack.c.l.b16 %v1912
        %v1981 = vunpack.c.l.b16 %v1913
        %v1982 = vunpack.c.l.b16 %v1914
        %v1983 = vunpack.c.l.b16 %v1915
        %v1984 = vunpack.c.l.b16 %v1916
        %v1985 = vunpack.c.l.b16 %v1917
        %v1986 = vunpack.c.l.b16 %v1918
        %v1987 = vunpack.c.l.b16 %v1919
        %v1988 = vunpack.c.l.b16 %v1920
        %v1989 = vunpack.c.l.b16 %v1921
        %v1990 = vunpack.c.l.b16 %v1922
        %v1991 = vunpack.c.l.b16 %v1923
        %v1992 = vunpack.c.l.b16 %v1924
        %v1993 = vunpack.c.l.b16 %v1925
        %v1994 = vunpack.c.l.b16 %v1926
        %v1995 = vunpack.c.l.b16 %v1927
        %v1996 = vunpack.c.l.b16 %v1928
        %v1997 = vunpack.c.l.b16 %v1929
        %v1998 = vunpack.c.l.b16 %v1930
        %v1999 = vunpack.c.l.b16 %v1931
        %v2000 = vunpack.c.l.b16 %v1932
        %v2001 = vunpack.c.l.b16 %v1933
        %v2002 = vunpack.c.l.b16 %v1934
        %v2003 = vunpack.c.l.b16 %v1935
        %v2004 = vunpack.c.l.b16 %v1936
        %v2005 = vunpack.c.l.b16 %v1937
        %v2006 = vunpack.c.l.b16 %v1938
        %v2007 = vunpack.c.l.b16 %v1939
        %v2008 = vpack.c.b16 %v1977, %v1976
        %v2009 = vpack.c.b16 %v1979, %v1978
        %v2010 = vpack.c.b16 %v1981, %v1980
        %v2011 = vpack.c.b16 %v1983, %v1982
        %v2012 = vpack.c.b16 %v1985, %v1984
        %v2013 = vpack.c.b16 %v1987, %v1986
        %v2014 = vpack.c.b16 %v1989, %v1988
        %v2015 = vpack.c.b16 %v1991, %v1990
        %v2016 = vpack.c.b16 %v1993, %v1992
        %v2017 = vpack.c.b16 %v1995, %v1994
        %v2018 = vpack.c.b16 %v1997, %v1996
        %v2019 = vpack.c.b16 %v1999, %v1998
        %v2020 = vpack.c.b16 %v2001, %v2000
        %v2021 = vpack.c.b16 %v2003, %v2002
        %v2022 = vpack.c.b16 %v2005, %v2004
        %v2023 = vpack.c.b16 %v2007, %v2006
        %2040 = vmatpush.bf16.msra.mxu0 %v2015
        %2041 = vmatpush.bf16.msra.mxu0 %v2014
        %2042 = vmatpush.bf16.msra.mxu0 %v2013
        %2043 = vmatpush.bf16.msra.mxu0 %v2012
        %2044 = vmatpush.bf16.msra.mxu0 %v2011
        %2045 = vmatpush.bf16.msra.mxu0 %v2010
        %2046 = vmatpush.bf16.msra.mxu0 %v2009
        %2047 = vmatpush.bf16.msra.mxu0 %v2008
        %2048 = vmatmul.bf16.gmra.mxu0 %v1906
        %v2049 = vpop.f32.mrf.mxu0
        %v2050 = vadd.f32 %v1942, %v2049
        %v2051 = vpop.f32.mrf.mxu0
        %2052 = vdwg.mxu0
        %2053 = vmatpush.bf16.msra.mxu0 %v2023
        %2054 = vmatpush.bf16.msra.mxu0 %v2022
        %2055 = vmatpush.bf16.msra.mxu0 %v2021
        %2056 = vmatpush.bf16.msra.mxu0 %v2020
        %2057 = vmatpush.bf16.msra.mxu0 %v2019
        %2058 = vmatpush.bf16.msra.mxu0 %v2018
        %2059 = vmatpush.bf16.msra.mxu0 %v2017
        %2060 = vmatpush.bf16.msra.mxu0 %v2016
        %2061 = vmatmul.bf16.gmra.mxu0 %v1907
        %v2062 = vpop.f32.mrf.mxu0
        %v2063 = vadd.f32 %v2050, %v2062
        %v2064 = vpop.f32.mrf.mxu0
        %2065 = vdwg.mxu0
        %v2066 = vadd.f32 %v2063, %v1758
        %v2067 = vld [vmem:[%s1028] sm:$0x1]
        %v2068 = vld [vmem:[%s1031] sm:$0x1]
        %2069 = vadd.xlane.f32.xlu0 %v2066
        %v2070 = vpop.xlane.xlu0 %2069
        %v2071 = vmul.f32 %v2070, %v1732
        %v2072 = vsub.f32 %v2066, %v2071
        %v2073 = vmul.f32 %v2072, %v2072
        %2074 = vadd.xlane.f32.xlu0 %v2073
        %v2075 = vpop.xlane.xlu0 %2074
        %v2076 = vmul.f32 %v2075, %v1732
        %v2077 = vadd.f32 %v2076, 1e-12
        %v2078 = vrsqrt.pop %v2077
        %v2079 = vmul.f32 %v2078, %v2077
        %v2080 = vmul.f32 %v2079, %v2078
        %v2081 = vmul.f32 0.5, %v2080
        %v2082 = vsub.f32 1.5, %v2081
        %v2083 = vmul.f32 %v2078, %v2082
        %vm2084 = vweird.f32 %v2077
        %vm2085 = vweird.f32 %v2078
        %vm2086 = vmor %vm2084, %vm2085
        %v2087 = vsel %vm2086, %v2078, %v2083
        %v2088 = vmul.f32 %v2072, %v2087
        %v2090 = vperm.slane %v2067, 0
        %v2092 = vmul.f32 %v2088, %v2090
        %v2094 = vperm.slane %v2068, 0
        %v2096 = vadd.f32 %v2092, %v2094
        %2097 = vst [vmem:[#allocation2] sm:$0xff] %v2096
        %p2098 = scmp.eq.s32.totalorder %s53, 1
        // Predicated region
        $region133: #{protbert_forward.1} parent=107 // pred_check
          %p2099 = pneg %p2098
        $region134: #{protbert_forward.1} parent=107 // pred_check_branch
          %2101 = sbr.rel (%p2099) target = $region136
        $region135: #{protbert_forward.1} parent=107 // pred_region
          %v2102 = vpack.c.bf16 %v2096, %v2096
          %v2103 = vld [vmem:[#allocation8] sm:$0xf]
          %v2104 = vld [vmem:[#allocation8 + $0x4] sm:$0xf]
          %v2105 = vld [vmem:[#allocation8 + $0x8] sm:$0xf]
          %v2106 = vld [vmem:[#allocation8 + $0xc] sm:$0xf]
          %v2107 = vld [vmem:[#allocation8 + $0x10] sm:$0xf]
          %v2108 = vld [vmem:[#allocation8 + $0x14] sm:$0xf]
          %v2109 = vld [vmem:[#allocation8 + $0x18] sm:$0xf]
          %v2110 = vld [vmem:[#allocation8 + $0x1c] sm:$0xf]
          %v2111 = vld [vmem:[#allocation8 + $0x20] sm:$0xf]
          %v2112 = vld [vmem:[#allocation8 + $0x24] sm:$0xf]
          %v2113 = vld [vmem:[#allocation8 + $0x28] sm:$0xf]
          %v2114 = vld [vmem:[#allocation8 + $0x2c] sm:$0xf]
          %v2115 = vld [vmem:[#allocation8 + $0x30] sm:$0xf]
          %v2116 = vld [vmem:[#allocation8 + $0x34] sm:$0xf]
          %v2117 = vld [vmem:[#allocation8 + $0x38] sm:$0xf]
          %v2118 = vld [vmem:[#allocation8 + $0x3c] sm:$0xf]
          %v2119 = vld [vmem:[%s17] sm:$0x1]
          %v2136 = vunpack.c.l.b16 %v2103
          %v2137 = vunpack.c.l.b16 %v2104
          %v2138 = vunpack.c.l.b16 %v2105
          %v2139 = vunpack.c.l.b16 %v2106
          %v2140 = vunpack.c.l.b16 %v2107
          %v2141 = vunpack.c.l.b16 %v2108
          %v2142 = vunpack.c.l.b16 %v2109
          %v2143 = vunpack.c.l.b16 %v2110
          %v2144 = vunpack.c.l.b16 %v2111
          %v2145 = vunpack.c.l.b16 %v2112
          %v2146 = vunpack.c.l.b16 %v2113
          %v2147 = vunpack.c.l.b16 %v2114
          %v2148 = vunpack.c.l.b16 %v2115
          %v2149 = vunpack.c.l.b16 %v2116
          %v2150 = vunpack.c.l.b16 %v2117
          %v2151 = vunpack.c.l.b16 %v2118
          %v2152 = vpack.c.b16 %v2137, %v2136
          %v2153 = vpack.c.b16 %v2139, %v2138
          %v2154 = vpack.c.b16 %v2141, %v2140
          %v2155 = vpack.c.b16 %v2143, %v2142
          %v2156 = vpack.c.b16 %v2145, %v2144
          %v2157 = vpack.c.b16 %v2147, %v2146
          %v2158 = vpack.c.b16 %v2149, %v2148
          %v2159 = vpack.c.b16 %v2151, %v2150
          %2168 = vmatpush.bf16.msra.mxu0 %v2159
          %2169 = vmatpush.bf16.msra.mxu0 %v2158
          %2170 = vmatpush.bf16.msra.mxu0 %v2157
          %2171 = vmatpush.bf16.msra.mxu0 %v2156
          %2172 = vmatpush.bf16.msra.mxu0 %v2155
          %2173 = vmatpush.bf16.msra.mxu0 %v2154
          %2174 = vmatpush.bf16.msra.mxu0 %v2153
          %2175 = vmatpush.bf16.msra.mxu0 %v2152
          %2176 = vmatmul.bf16.gmra.mxu0 %v2102
          %v2177 = vpop.f32.mrf.mxu0
          %v2178 = vadd.f32 %v2119, %v2177
          %v2179 = vpop.f32.mrf.mxu0
          %2180 = vdwg.mxu0
          %v2181 = vtanh.pop %v2178
          %2182 = vst [vmem:[%s982] sm:$0x1] %v2181
          %v2183 = vpack.c.bf16 %v2181, %v2181
          %v2184 = vld [vmem:[#allocation9] sm:$0xf]
          %v2185 = vld [vmem:[#allocation9 + $0x4] sm:$0xf]
          %v2186 = vld [vmem:[#allocation9 + $0x8] sm:$0xf]
          %v2187 = vld [vmem:[#allocation9 + $0xc] sm:$0xf]
          %v2188 = vld [vmem:[#allocation9 + $0x10] sm:$0xf]
          %v2189 = vld [vmem:[#allocation9 + $0x14] sm:$0xf]
          %v2190 = vld [vmem:[#allocation9 + $0x18] sm:$0xf]
          %v2191 = vld [vmem:[#allocation9 + $0x1c] sm:$0xf]
          %v2192 = vld [vmem:[#allocation9 + $0x20] sm:$0xf]
          %v2193 = vld [vmem:[#allocation9 + $0x24] sm:$0xf]
          %v2194 = vld [vmem:[#allocation9 + $0x28] sm:$0xf]
          %v2195 = vld [vmem:[#allocation9 + $0x2c] sm:$0xf]
          %v2196 = vld [vmem:[#allocation9 + $0x30] sm:$0xf]
          %v2197 = vld [vmem:[#allocation9 + $0x34] sm:$0xf]
          %v2198 = vld [vmem:[#allocation9 + $0x38] sm:$0xf]
          %v2199 = vld [vmem:[#allocation9 + $0x3c] sm:$0xf]
          %v2200 = vld [vmem:[%s19] sm:$0x1]
          %v2217 = vunpack.c.l.b16 %v2184
          %v2218 = vunpack.c.l.b16 %v2185
          %v2219 = vunpack.c.l.b16 %v2186
          %v2220 = vunpack.c.l.b16 %v2187
          %v2221 = vunpack.c.l.b16 %v2188
          %v2222 = vunpack.c.l.b16 %v2189
          %v2223 = vunpack.c.l.b16 %v2190
          %v2224 = vunpack.c.l.b16 %v2191
          %v2225 = vunpack.c.l.b16 %v2192
          %v2226 = vunpack.c.l.b16 %v2193
          %v2227 = vunpack.c.l.b16 %v2194
          %v2228 = vunpack.c.l.b16 %v2195
          %v2229 = vunpack.c.l.b16 %v2196
          %v2230 = vunpack.c.l.b16 %v2197
          %v2231 = vunpack.c.l.b16 %v2198
          %v2232 = vunpack.c.l.b16 %v2199
          %v2233 = vpack.c.b16 %v2218, %v2217
          %v2234 = vpack.c.b16 %v2220, %v2219
          %v2235 = vpack.c.b16 %v2222, %v2221
          %v2236 = vpack.c.b16 %v2224, %v2223
          %v2237 = vpack.c.b16 %v2226, %v2225
          %v2238 = vpack.c.b16 %v2228, %v2227
          %v2239 = vpack.c.b16 %v2230, %v2229
          %v2240 = vpack.c.b16 %v2232, %v2231
          %2249 = vmatpush.bf16.msra.mxu0 %v2240
          %2250 = vmatpush.bf16.msra.mxu0 %v2239
          %2251 = vmatpush.bf16.msra.mxu0 %v2238
          %2252 = vmatpush.bf16.msra.mxu0 %v2237
          %2253 = vmatpush.bf16.msra.mxu0 %v2236
          %2254 = vmatpush.bf16.msra.mxu0 %v2235
          %2255 = vmatpush.bf16.msra.mxu0 %v2234
          %2256 = vmatpush.bf16.msra.mxu0 %v2233
          %2257 = vmatmul.bf16.gmra.mxu0 %v2183
          %v2258 = vpop.f32.mrf.mxu0
          %v2259 = vadd.f32 %v2200, %v2258
          %v2260 = vpop.f32.mrf.mxu0
          %2261 = vdwg.mxu0
          %v2262 = vmax.f32 %v2259, 0.0
          %v2263 = vpack.c.bf16 %v2262, %v2262
          %v2264 = vld [vmem:[#allocation11] sm:$0xf]
          %v2265 = vld [vmem:[#allocation11 + $0x4] sm:$0xf]
          %v2266 = vld [vmem:[#allocation11 + $0x8] sm:$0xf]
          %v2267 = vld [vmem:[#allocation11 + $0xc] sm:$0xf]
          %v2268 = vld [vmem:[#allocation11 + $0x10] sm:$0xf]
          %v2269 = vld [vmem:[#allocation11 + $0x14] sm:$0xf]
          %v2270 = vld [vmem:[#allocation11 + $0x18] sm:$0xf]
          %v2271 = vld [vmem:[#allocation11 + $0x1c] sm:$0xf]
          %v2272 = vld [vmem:[#allocation11 + $0x20] sm:$0xf]
          %v2273 = vld [vmem:[#allocation11 + $0x24] sm:$0xf]
          %v2274 = vld [vmem:[#allocation11 + $0x28] sm:$0xf]
          %v2275 = vld [vmem:[#allocation11 + $0x2c] sm:$0xf]
          %v2276 = vld [vmem:[#allocation11 + $0x30] sm:$0xf]
          %v2277 = vld [vmem:[#allocation11 + $0x34] sm:$0xf]
          %v2278 = vld [vmem:[#allocation11 + $0x38] sm:$0xf]
          %v2279 = vld [vmem:[#allocation11 + $0x3c] sm:$0xf]
          %v2280 = vld [vmem:[%s21] sm:$0x1]
          %v2297 = vunpack.c.l.b16 %v2264
          %v2298 = vunpack.c.l.b16 %v2265
          %v2299 = vunpack.c.l.b16 %v2266
          %v2300 = vunpack.c.l.b16 %v2267
          %v2301 = vunpack.c.l.b16 %v2268
          %v2302 = vunpack.c.l.b16 %v2269
          %v2303 = vunpack.c.l.b16 %v2270
          %v2304 = vunpack.c.l.b16 %v2271
          %v2305 = vunpack.c.l.b16 %v2272
          %v2306 = vunpack.c.l.b16 %v2273
          %v2307 = vunpack.c.l.b16 %v2274
          %v2308 = vunpack.c.l.b16 %v2275
          %v2309 = vunpack.c.l.b16 %v2276
          %v2310 = vunpack.c.l.b16 %v2277
          %v2311 = vunpack.c.l.b16 %v2278
          %v2312 = vunpack.c.l.b16 %v2279
          %v2313 = vpack.c.b16 %v2298, %v2297
          %v2314 = vpack.c.b16 %v2300, %v2299
          %v2315 = vpack.c.b16 %v2302, %v2301
          %v2316 = vpack.c.b16 %v2304, %v2303
          %v2317 = vpack.c.b16 %v2306, %v2305
          %v2318 = vpack.c.b16 %v2308, %v2307
          %v2319 = vpack.c.b16 %v2310, %v2309
          %v2320 = vpack.c.b16 %v2312, %v2311
          %2329 = vmatpush.bf16.msra.mxu0 %v2320
          %2330 = vmatpush.bf16.msra.mxu0 %v2319
          %2331 = vmatpush.bf16.msra.mxu0 %v2318
          %2332 = vmatpush.bf16.msra.mxu0 %v2317
          %2333 = vmatpush.bf16.msra.mxu0 %v2316
          %2334 = vmatpush.bf16.msra.mxu0 %v2315
          %2335 = vmatpush.bf16.msra.mxu0 %v2314
          %2336 = vmatpush.bf16.msra.mxu0 %v2313
          %2337 = vmatmul.bf16.gmra.mxu0 %v2263
          %v2338 = vpop.f32.mrf.mxu0
          %v2339 = vadd.f32 %v2280, %v2338
          %v2340 = vpop.f32.mrf.mxu0
          %2341 = vdwg.mxu0
          %2342 = vst [vmem:[%s988] sm:$0x1] %v2339
        $region136: #{protbert_forward.1} parent=107 // pred_fallthru
          _
        %s2343 = sand.u32 %s600, 1
        %s2344 = scalar_lea.sflag [#allocation5], %s2343
        %s2345 = sand.u32 %s600, 1
        %s2346 = scalar_lea.vmem [#allocation12], %s2345
        %s2347 = sand.u32 %s626, 1
        %s2348 = scalar_lea.sflag [#allocation14], %s2347
        %s2349 = sand.u32 %s626, 1
        %s2350 = scalar_lea.vmem [#allocation13], %s2349
        // Predicated region
        $region137: #{protbert_forward.1} parent=107 // pred_check
          %p2351 = pneg %p610
        $region138: #{protbert_forward.1} parent=107 // pred_check_branch
          %2353 = sbr.rel (%p2351) target = $region140
        $region139: #{protbert_forward.1} parent=107 // pred_region
          %2355 = vsyncadd %s2344, 0
          %s2356 = scalar_lea.hbm %s22, %s52
          %s2358 = sshll.u32 %s2346, 4
          %s2359 = int_to_ptr.vmem [resolvable:$true] %s2358
          %s2360 = sshll.u32 %s2356, 4
          %s2361 = int_to_ptr.hbm [resolvable:$true] %s2360
          %2363 = dma.vmem_to_hbm [thread:$0]  %s2359, 16, %s2361, %s2344
        $region140: #{protbert_forward.1} parent=107 // pred_fallthru
          _
        // Predicated region
        $region141: #{protbert_forward.1} parent=107 // pred_check
          %p2364 = pneg %p636
        $region142: #{protbert_forward.1} parent=107 // pred_check_branch
          %2366 = sbr.rel (%p2364) target = $region144
        $region143: #{protbert_forward.1} parent=107 // pred_region
          %2368 = vsyncadd %s2348, 0
          %s2369 = scalar_lea.hbm %s23, %s52
          %s2371 = sshll.u32 %s2350, 4
          %s2372 = int_to_ptr.vmem [resolvable:$true] %s2371
          %s2373 = sshll.u32 %s2369, 4
          %s2374 = int_to_ptr.hbm [resolvable:$true] %s2373
          %2376 = dma.vmem_to_hbm [thread:$0]  %s2372, 16, %s2374, %s2348
        $region144: #{protbert_forward.1} parent=107 // pred_fallthru
          _
      $region108: #{protbert_forward.1} parent=5 // pred_fallthru
        _
      %p2377 = scmp.le.s32.totalorder 2, %s43
      // Predicated region
      $region145: #{protbert_forward.1} parent=5 // pred_check
        %p2378 = pneg %p2377
      $region146: #{protbert_forward.1} parent=5 // pred_check_branch
        %2380 = sbr.rel (%p2378) target = $region148
      $region147: #{protbert_forward.1} parent=5 // pred_region
        %s2381 = ssub.s32 %s43, 2
        // Predicated region
        $region149: #{protbert_forward.1} parent=147 // pred_check
          %p2382 = pneg %p616
        $region150: #{protbert_forward.1} parent=147 // pred_check_branch
          %2384 = sbr.rel (%p2382) target = $region152
        $region151: #{protbert_forward.1} parent=147 // pred_region
          %s2385 = sand.u32 %s601, 1
          %s2386 = scalar_lea.sflag [#allocation5], %s2385
          %s2387 = sand.u32 %s601, 1
          %s2388 = scalar_lea.vmem [#allocation12], %s2387
          %2390 = dma.done %s2386, 16
        $region152: #{protbert_forward.1} parent=147 // pred_fallthru
          _
        // Predicated region
        $region153: #{protbert_forward.1} parent=147 // pred_check
          %p2391 = pneg %p642
        $region154: #{protbert_forward.1} parent=147 // pred_check_branch
          %2393 = sbr.rel (%p2391) target = $region156
        $region155: #{protbert_forward.1} parent=147 // pred_region
          %s2394 = sand.u32 %s627, 1
          %s2395 = scalar_lea.sflag [#allocation14], %s2394
          %s2396 = sand.u32 %s627, 1
          %s2397 = scalar_lea.vmem [#allocation13], %s2396
          %2399 = dma.done %s2395, 16
        $region156: #{protbert_forward.1} parent=147 // pred_fallthru
          _
      $region148: #{protbert_forward.1} parent=5 // pred_fallthru
        _
    $region6: #{protbert_forward.1} parent=1 // loop_footer
      %s47 = sadd.s32 1, %s43
    $region7: #{protbert_forward.1} parent=1 // loop_footer_branch
      %42 = sbr.rel target = $region3
    $region8: #{protbert_forward.1} parent=1 // loop_exit
      _
    %2400 = vsyncpa [#allocation4], 1
    %s2401 = scalar_lea.sflag [#allocation4], 1
    %2402 = vsyncpa %s2401, 1
    %2403 = vsyncpa [#allocation7], 1
    %s2404 = scalar_lea.sflag [#allocation7], 1
    %2405 = vsyncpa %s2404, 1
    %2406 = vsyncpa [#allocation10], 1
    %2407 = vsyncpa [#allocation5], 1
    %s2408 = scalar_lea.sflag [#allocation5], 1
    %2409 = vsyncpa %s2408, 1
    %2410 = vsyncpa [#allocation14], 1
    %s2411 = scalar_lea.sflag [#allocation14], 1
    %2412 = vsyncpa %s2411, 1

</llo_original>
